<compile_context>
chip_gen: v5e
topology: v5e:2x2
jax: 0.10.0
libtpu: 0.0.40
codegen_flags: <defaults>
</compile_context>

<pallas_src>
import functools

import jax
import jax.numpy as jnp
from jax.experimental import pallas as pl
from jax.experimental.pallas import tpu as pltpu


_VMEM_LIMIT = 32 * 1024 * 1024  # safe scoped budget on v5e/v6e (128 MiB) and v7x (64 MiB phys)


def _round_up(x, m):
    return (x + m - 1) // m * m


def _as_bf16(v):
    """MXU operand cast.  int8 (+-1/0) goes via f32 (exact); bf16 passes through."""
    if v.dtype == jnp.bfloat16:
        return v
    return v.astype(jnp.float32).astype(jnp.bfloat16)


# ----------------------------------------------------------------------------
# Pallas kernels: fused matmul + BatchNorm affine (+ residual add)
# ----------------------------------------------------------------------------
def _mm_bn_kernel(a_ref, b_ref, scale_ref, shift_ref, o_ref):
    acc = jnp.dot(_as_bf16(a_ref[...]), _as_bf16(b_ref[...]),
                  preferred_element_type=jnp.float32)
    o_ref[...] = acc * scale_ref[...] + shift_ref[...]


def _mm_bn_res_kernel(a_ref, b_ref, scale_ref, shift_ref, res_ref, o_ref):
    acc = jnp.dot(_as_bf16(a_ref[...]), _as_bf16(b_ref[...]),
                  preferred_element_type=jnp.float32)
    o_ref[...] = acc * scale_ref[...] + shift_ref[...] + res_ref[...]


# ----------------------------------------------------------------------------
# Wrapper around the kernels
# ----------------------------------------------------------------------------
def fused_matmul_bn(lhs, rhs, scale2, shift2, res=None):
    """o[r, l] = (sum_k lhs[r, k] * rhs[k, l]) * scale + shift (+ res[r, l]).

    scale2 / shift2 are already broadcast-shaped: (R, 1) when the BN channel is
    the row axis, (1, L) when it is the lane axis.  Output is (R, L) f32 with
    the lane axis tiled (lane-dense stores).
    """
    r, k = lhs.shape
    _, l = rhs.shape

    # Lane tile: full block when small, otherwise multiples of 128 so stores
    # stay unmasked; >= 2 grid steps when L allows it (v7x: 2 TensorCores).
    if l <= 256:
        tl = l                                    # single full block (exempt)
    elif l <= 1024:
        tl = _round_up(pl.cdiv(l, 2), 128)
    else:
        tl = 512
    grid = (pl.cdiv(l, tl),)

    def _chan_spec(v):
        if v.shape[0] == 1:                       # (1, L): BN channel on lanes
            return pl.BlockSpec((1, tl), lambda i: (0, i))
        return pl.BlockSpec((v.shape[0], 1), lambda i: (0, 0))

    in_specs = [
        pl.BlockSpec((r, k), lambda i: (0, 0)),   # lhs: whole matrix, resident
        pl.BlockSpec((k, tl), lambda i: (0, i)),  # rhs: lane-tiled
        _chan_spec(scale2),
        _chan_spec(shift2),
    ]
    args = [lhs, rhs, scale2.astype(jnp.float32), shift2.astype(jnp.float32)]

    if res is None:
        kernel = _mm_bn_kernel
        io_alias = {}
    else:
        kernel = _mm_bn_res_kernel
        in_specs.append(pl.BlockSpec((r, tl), lambda i: (0, i)))
        args.append(res.astype(jnp.float32))
        io_alias = {4: 0}                         # reuse residual buffer for output

    return pl.pallas_call(
        kernel,
        out_shape=jax.ShapeDtypeStruct((r, l), jnp.float32),
        grid=grid,
        in_specs=in_specs,
        out_specs=pl.BlockSpec((r, tl), lambda i: (0, i)),
        input_output_aliases=io_alias,
        compiler_params=pltpu.CompilerParams(
            dimension_semantics=("parallel",),
            vmem_limit_bytes=_VMEM_LIMIT),
    )(*args)


def conv_bn(x, w, bn, *, stride, pad, binarize=False, residual=None):
    """Conv2d (no bias, torch OIHW weights) + BatchNorm (inference) [+ residual].

    x: (Cin, N, H, W); residual: (Cout, N, Ho, Wo) or None; returns (Cout, N, Ho, Wo).
    """
    cout, cin, kh, kw = w.shape
    gamma, beta, mean, var = bn
    scale = (gamma / jnp.sqrt(var + 1e-5)).astype(jnp.float32)
    shift = (beta - mean * scale).astype(jnp.float32)

    if binarize:
        # Bi-Real "no scaling" STE forward: sign() on activations & weights,
        # hoisted out of the kernel.  +-1/0 is exact in int8 -> 1-byte operand
        # DMA; cast to bf16 happens inside the kernel, just before the MXU.
        x_op = jnp.sign(x).astype(jnp.int8)
        w_op = jnp.sign(w).astype(jnp.int8)
    else:
        # Float conv (conv1 / downsample): bf16 operands, f32 accumulation.
        x_op = x.astype(jnp.bfloat16)
        w_op = w.astype(jnp.bfloat16)

    if pad:
        x_op = jnp.pad(x_op, ((0, 0), (0, 0), (pad, pad), (pad, pad)))
    _, n, hp, wp = x_op.shape
    ho = (hp - kh) // stride + 1
    wo = (wp - kw) // stride + 1
    m = n * ho * wo
    k = kh * kw * cin

    # im2col taps (plain-JAX glue, fused by XLA; stays int8/bf16 in HBM).
    taps = [x_op[:, :, i:i + stride * ho:stride, j:j + stride * wo:stride]
            for i in range(kh) for j in range(kw)]            # each (Cin,N,Ho,Wo)
    stk = jnp.stack(taps, axis=0)                             # (T, Cin, N, Ho, Wo)
    wmat = jnp.transpose(w_op, (0, 2, 3, 1)).reshape(cout, k)  # (Cout, K), K=(tap,cin)

    if m >= cout:
        # (Cout, M) orientation: lanes = M.
        cols = stk.reshape(k, m)                               # (K, M)
        res2 = None if residual is None else residual.reshape(cout, m)
        y = fused_matmul_bn(wmat, cols,
                            scale.reshape(cout, 1), shift.reshape(cout, 1), res2)
        return y.reshape(cout, n, ho, wo)
    else:
        # (M, Cout) orientation: lanes = Cout (deep layers where M is tiny).
        cols_t = jnp.transpose(stk, (2, 3, 4, 0, 1)).reshape(m, k)   # (M, K)
        res2 = (None if residual is None
                else jnp.transpose(residual.reshape(cout, m)))       # (M, Cout)
        y = fused_matmul_bn(cols_t, jnp.transpose(wmat),
                            scale.reshape(1, cout), shift.reshape(1, cout), res2)
        return jnp.transpose(y).reshape(cout, n, ho, wo)


# ----------------------------------------------------------------------------
# Pooling: plain XLA (at these shapes a pallas_call is pure launch overhead)
# ----------------------------------------------------------------------------
def maxpool_3x3_s2_p1(x):
    c, n, h, w = x.shape
    neg = jnp.finfo(x.dtype).min
    xp = jnp.pad(x, ((0, 0), (0, 0), (1, 1), (1, 1)), constant_values=neg)
    ho = (h + 2 - 3) // 2 + 1
    wo = (w + 2 - 3) // 2 + 1
    views = [xp[:, :, i:i + 2 * ho:2, j:j + 2 * wo:2]
             for i in range(3) for j in range(3)]
    return functools.reduce(jnp.maximum, views)


def avgpool_2x2_s2(x):
    c, n, h, w = x.shape
    return x.reshape(c, n, h // 2, 2, w // 2, 2).mean(axis=(3, 5))


def global_avgpool(x):
    # (C, N, H, W) -> (N, C)
    return jnp.transpose(jnp.mean(x, axis=(2, 3)))


# ----------------------------------------------------------------------------
# Parameter construction (deterministic, shapes follow the module __init__)
# ----------------------------------------------------------------------------
def init_params(key, layers=(1, 1, 1), num_classes=10):
    keys = list(jax.random.split(key, 128))
    kidx = [0]

    def nxt():
        k = keys[kidx[0]]
        kidx[0] += 1
        return k

    def normal(shape, scale=0.1):
        return scale * jax.random.normal(nxt(), shape, jnp.float32)

    def bn_init(c):
        gamma = 1.0 + 0.1 * jax.random.normal(nxt(), (c,), jnp.float32)
        beta = 0.1 * jax.random.normal(nxt(), (c,), jnp.float32)
        mean = 0.1 * jax.random.normal(nxt(), (c,), jnp.float32)
        var = 1.0 + 0.1 * jnp.abs(jax.random.normal(nxt(), (c,), jnp.float32))
        return (gamma, beta, mean, var)

    params = {"conv1_w": normal((16, 3, 3, 3)), "bn1": bn_init(16)}
    inplanes = 16
    cfg = [(16, layers[0], 1), (32, layers[1], 2), (64, layers[2], 2)]
    for li, (planes, nblocks, stride) in enumerate(cfg, start=1):
        layer = []
        for b in range(nblocks):
            s = stride if b == 0 else 1
            blk = {"w": normal((planes, inplanes, 3, 3)),
                   "bn": bn_init(planes),
                   "stride": s}
            if s != 1 or inplanes != planes:
                blk["down_w"] = normal((planes, inplanes, 1, 1))
                blk["down_bn"] = bn_init(planes)
            layer.append(blk)
            inplanes = planes
        params[f"layer{li}"] = layer
    params["fc_w"] = normal((num_classes, 64))
    params["fc_b"] = normal((num_classes,))
    return params


# ----------------------------------------------------------------------------
# Full forward pass (BiRealNet.forward)
# ----------------------------------------------------------------------------
def birealnet_forward(params, x_nchw):
    x = jnp.transpose(x_nchw.astype(jnp.float32), (1, 0, 2, 3))  # NCHW -> CNHW

    # stem: conv1 + bn1 (one fused Pallas matmul) + maxpool (XLA)
    x = conv_bn(x, params["conv1_w"], params["bn1"], stride=1, pad=1)
    x = maxpool_3x3_s2_p1(x)

    # layer1 / layer2 / layer3 (Bi-Real basic blocks)
    for lname in ("layer1", "layer2", "layer3"):
        for blk in params[lname]:
            residual = x
            if "down_w" in blk:
                # downsample = AvgPool2d(2, stride=2) -> conv1x1 -> BN
                r = avgpool_2x2_s2(x)
                residual = conv_bn(r, blk["down_w"], blk["down_bn"],
                                   stride=1, pad=0)
            # sign(x) -> sign-weight 3x3 conv -> BN -> + residual (one kernel)
            x = conv_bn(x, blk["w"], blk["bn"], stride=blk["stride"], pad=1,
                        binarize=True, residual=residual)

    # adaptive avgpool (1,1) + flatten + fc (both tiny -> plain XLA)
    x = global_avgpool(x)                                     # (N, 64)
    return x @ jnp.transpose(params["fc_w"]) + params["fc_b"]


if __name__ == "__main__":
    key = jax.random.PRNGKey(0)
    pkey, xkey = jax.random.split(key)

    # depth=10 -> (depth-4)%6==0, n=1 -> layers=(1,1,1); num_classes=10
    params = init_params(pkey, layers=(1, 1, 1), num_classes=10)
    x = jax.random.normal(xkey, (2, 3, 16, 16), jnp.float32)  # NCHW like PyTorch

    fwd = jax.jit(lambda inp: birealnet_forward(params, inp))
    out = jax.block_until_ready(fwd(x))
    assert out.shape == (2, 10), out.shape
    assert bool(jnp.all(jnp.isfinite(out)))
    print("KERNEL_OK")
</pallas_src>

<mosaic_0001>
module attributes {stable_mosaic.version = 11 : i64} {
  func.func @_mm_bn_kernel(%arg0: i32, %arg1: memref<16x27xbf16, #tpu.memory_space<vmem>>, %arg2: memref<27x256xbf16, #tpu.memory_space<vmem>>, %arg3: memref<16x1xf32, #tpu.memory_space<vmem>>, %arg4: memref<16x1xf32, #tpu.memory_space<vmem>>, %arg5: memref<16x256xf32, #tpu.memory_space<vmem>>) attributes {dimension_semantics = [#tpu.dimension_semantics<parallel>], iteration_bounds = array<i64: 2>, scalar_prefetch = 0 : i64, scratch_operands = 0 : i64, tpu.core_type = #tpu.core_type<tc>, window_params = [{pipeline_mode = #tpu.pipeline_mode<synchronous>, transform_indices = @transform_0, window_bounds = array<i64: 16, 27>}, {transform_indices = @transform_1, window_bounds = array<i64: 27, 256>}, {pipeline_mode = #tpu.pipeline_mode<synchronous>, transform_indices = @transform_2, window_bounds = array<i64: 16, 1>}, {pipeline_mode = #tpu.pipeline_mode<synchronous>, transform_indices = @transform_3, window_bounds = array<i64: 16, 1>}, {transform_indices = @transform_4, window_bounds = array<i64: 16, 256>}]} {
    %c0 = arith.constant 0 : index
    %c0_0 = arith.constant 0 : index
    %0 = vector.load %arg1[%c0, %c0_0] : memref<16x27xbf16, #tpu.memory_space<vmem>>, vector<16x27xbf16>
    %c0_1 = arith.constant 0 : index
    %c0_2 = arith.constant 0 : index
    %1 = vector.load %arg2[%c0_1, %c0_2] : memref<27x256xbf16, #tpu.memory_space<vmem>>, vector<27x256xbf16>
    %cst = arith.constant dense<0.000000e+00> : vector<16x256xf32>
    %2 = tpu.matmul %0, %1, %cst {dimension_numbers = #tpu.dot_dimension_numbers<[1], [0], [0], [1], [0, 0, 1, 1], [], []>} : vector<16x27xbf16>, vector<27x256xbf16>, vector<16x256xf32> -> vector<16x256xf32>
    %c0_3 = arith.constant 0 : index
    %c0_4 = arith.constant 0 : index
    %3 = vector.load %arg3[%c0_3, %c0_4] : memref<16x1xf32, #tpu.memory_space<vmem>>, vector<16x1xf32>
    %4 = vector.broadcast %3 : vector<16x1xf32> to vector<16x256xf32>
    %5 = arith.mulf %2, %4 : vector<16x256xf32>
    %c0_5 = arith.constant 0 : index
    %c0_6 = arith.constant 0 : index
    %6 = vector.load %arg4[%c0_5, %c0_6] : memref<16x1xf32, #tpu.memory_space<vmem>>, vector<16x1xf32>
    %7 = vector.broadcast %6 : vector<16x1xf32> to vector<16x256xf32>
    %8 = arith.addf %5, %7 : vector<16x256xf32>
    %c0_7 = arith.constant 0 : index
    %c0_8 = arith.constant 0 : index
    %9 = vector.load %arg5[%c0_7, %c0_8] : memref<16x256xf32, #tpu.memory_space<vmem>>, vector<16x256xf32>
    tpu.vector_store %arg5[%c0_7, %c0_8], %8 {strides = array<i32>} : memref<16x256xf32, #tpu.memory_space<vmem>>, vector<16x256xf32>,
    return
  }
  func.func @transform_0(%arg0: i32) -> (i32, i32) {
    %c0_i32 = arith.constant 0 : i32
    %c0_i32_0 = arith.constant 0 : i32
    %c0_i32_1 = arith.constant 0 : i32
    return %c0_i32, %c0_i32_0 : i32, i32
  }
  func.func @transform_1(%arg0: i32) -> (i32, i32) {
    %c0_i32 = arith.constant 0 : i32
    %c0_i32_0 = arith.constant 0 : i32
    return %c0_i32, %arg0 : i32, i32
  }
  func.func @transform_2(%arg0: i32) -> (i32, i32) {
    %c0_i32 = arith.constant 0 : i32
    %c0_i32_0 = arith.constant 0 : i32
    %c0_i32_1 = arith.constant 0 : i32
    return %c0_i32, %c0_i32_0 : i32, i32
  }
  func.func @transform_3(%arg0: i32) -> (i32, i32) {
    %c0_i32 = arith.constant 0 : i32
    %c0_i32_0 = arith.constant 0 : i32
    %c0_i32_1 = arith.constant 0 : i32
    return %c0_i32, %c0_i32_0 : i32, i32
  }
  func.func @transform_4(%arg0: i32) -> (i32, i32) {
    %c0_i32 = arith.constant 0 : i32
    %c0_i32_0 = arith.constant 0 : i32
    return %c0_i32, %arg0 : i32, i32
  }
}

module attributes {stable_mosaic.version = 11 : i64} {
  func.func @_mm_bn_res_kernel(%arg0: i32, %arg1: memref<16x144xi8, #tpu.memory_space<vmem>>, %arg2: memref<144x128xi8, #tpu.memory_space<vmem>>, %arg3: memref<16x1xf32, #tpu.memory_space<vmem>>, %arg4: memref<16x1xf32, #tpu.memory_space<vmem>>, %arg5: memref<16x128xf32, #tpu.memory_space<vmem>>, %arg6: memref<16x128xf32, #tpu.memory_space<vmem>>) attributes {dimension_semantics = [#tpu.dimension_semantics<parallel>], iteration_bounds = array<i64: 1>, scalar_prefetch = 0 : i64, scratch_operands = 0 : i64, tpu.core_type = #tpu.core_type<tc>, window_params = [{pipeline_mode = #tpu.pipeline_mode<synchronous>, transform_indices = @transform_0, window_bounds = array<i64: 16, 144>}, {transform_indices = @transform_1, window_bounds = array<i64: 144, 128>}, {pipeline_mode = #tpu.pipeline_mode<synchronous>, transform_indices = @transform_2, window_bounds = array<i64: 16, 1>}, {pipeline_mode = #tpu.pipeline_mode<synchronous>, transform_indices = @transform_3, window_bounds = array<i64: 16, 1>}, {transform_indices = @transform_4, window_bounds = array<i64: 16, 128>}, {transform_indices = @transform_5, window_bounds = array<i64: 16, 128>}]} {
    %c0 = arith.constant 0 : index
    %c0_0 = arith.constant 0 : index
    %0 = vector.load %arg1[%c0, %c0_0] : memref<16x144xi8, #tpu.memory_space<vmem>>, vector<16x144xi8>
    %1 = arith.sitofp %0 : vector<16x144xi8> to vector<16x144xf32>
    %2 = arith.truncf %1 : vector<16x144xf32> to vector<16x144xbf16>
    %c0_1 = arith.constant 0 : index
    %c0_2 = arith.constant 0 : index
    %3 = vector.load %arg2[%c0_1, %c0_2] : memref<144x128xi8, #tpu.memory_space<vmem>>, vector<144x128xi8>
    %4 = arith.sitofp %3 : vector<144x128xi8> to vector<144x128xf32>
    %5 = arith.truncf %4 : vector<144x128xf32> to vector<144x128xbf16>
    %cst = arith.constant dense<0.000000e+00> : vector<16x128xf32>
    %6 = tpu.matmul %2, %5, %cst {dimension_numbers = #tpu.dot_dimension_numbers<[1], [0], [0], [1], [0, 0, 1, 1], [], []>} : vector<16x144xbf16>, vector<144x128xbf16>, vector<16x128xf32> -> vector<16x128xf32>
    %c0_3 = arith.constant 0 : index
    %c0_4 = arith.constant 0 : index
    %7 = vector.load %arg3[%c0_3, %c0_4] : memref<16x1xf32, #tpu.memory_space<vmem>>, vector<16x1xf32>
    %8 = vector.broadcast %7 : vector<16x1xf32> to vector<16x128xf32>
    %9 = arith.mulf %6, %8 : vector<16x128xf32>
    %c0_5 = arith.constant 0 : index
    %c0_6 = arith.constant 0 : index
    %10 = vector.load %arg4[%c0_5, %c0_6] : memref<16x1xf32, #tpu.memory_space<vmem>>, vector<16x1xf32>
    %11 = vector.broadcast %10 : vector<16x1xf32> to vector<16x128xf32>
    %12 = arith.addf %9, %11 : vector<16x128xf32>
    %c0_7 = arith.constant 0 : index
    %c0_8 = arith.constant 0 : index
    %13 = vector.load %arg5[%c0_7, %c0_8] : memref<16x128xf32, #tpu.memory_space<vmem>>, vector<16x128xf32>
    %14 = arith.addf %12, %13 : vector<16x128xf32>
    %c0_9 = arith.constant 0 : index
    %c0_10 = arith.constant 0 : index
    %15 = vector.load %arg6[%c0_9, %c0_10] : memref<16x128xf32, #tpu.memory_space<vmem>>, vector<16x128xf32>
    tpu.vector_store %arg6[%c0_9, %c0_10], %14 {strides = array<i32>} : memref<16x128xf32, #tpu.memory_space<vmem>>, vector<16x128xf32>,
    return
  }
  func.func @transform_0(%arg0: i32) -> (i32, i32) {
    %c0_i32 = arith.constant 0 : i32
    %c0_i32_0 = arith.constant 0 : i32
    %c0_i32_1 = arith.constant 0 : i32
    return %c0_i32, %c0_i32_0 : i32, i32
  }
  func.func @transform_1(%arg0: i32) -> (i32, i32) {
    %c0_i32 = arith.constant 0 : i32
    %c0_i32_0 = arith.constant 0 : i32
    return %c0_i32, %arg0 : i32, i32
  }
  func.func @transform_2(%arg0: i32) -> (i32, i32) {
    %c0_i32 = arith.constant 0 : i32
    %c0_i32_0 = arith.constant 0 : i32
    %c0_i32_1 = arith.constant 0 : i32
    return %c0_i32, %c0_i32_0 : i32, i32
  }
  func.func @transform_3(%arg0: i32) -> (i32, i32) {
    %c0_i32 = arith.constant 0 : i32
    %c0_i32_0 = arith.constant 0 : i32
    %c0_i32_1 = arith.constant 0 : i32
    return %c0_i32, %c0_i32_0 : i32, i32
  }
  func.func @transform_4(%arg0: i32) -> (i32, i32) {
    %c0_i32 = arith.constant 0 : i32
    %c0_i32_0 = arith.constant 0 : i32
    return %c0_i32, %arg0 : i32, i32
  }
  func.func @transform_5(%arg0: i32) -> (i32, i32) {
    %c0_i32 = arith.constant 0 : i32
    %c0_i32_0 = arith.constant 0 : i32
    return %c0_i32, %arg0 : i32, i32
  }
}

module attributes {stable_mosaic.version = 11 : i64} {
  func.func @_mm_bn_kernel(%arg0: i32, %arg1: memref<32x16xbf16, #tpu.memory_space<vmem>>, %arg2: memref<16x32xbf16, #tpu.memory_space<vmem>>, %arg3: memref<32x1xf32, #tpu.memory_space<vmem>>, %arg4: memref<32x1xf32, #tpu.memory_space<vmem>>, %arg5: memref<32x32xf32, #tpu.memory_space<vmem>>) attributes {dimension_semantics = [#tpu.dimension_semantics<parallel>], iteration_bounds = array<i64: 1>, scalar_prefetch = 0 : i64, scratch_operands = 0 : i64, tpu.core_type = #tpu.core_type<tc>, window_params = [{pipeline_mode = #tpu.pipeline_mode<synchronous>, transform_indices = @transform_0, window_bounds = array<i64: 32, 16>}, {transform_indices = @transform_1, window_bounds = array<i64: 16, 32>}, {pipeline_mode = #tpu.pipeline_mode<synchronous>, transform_indices = @transform_2, window_bounds = array<i64: 32, 1>}, {pipeline_mode = #tpu.pipeline_mode<synchronous>, transform_indices = @transform_3, window_bounds = array<i64: 32, 1>}, {transform_indices = @transform_4, window_bounds = array<i64: 32, 32>}]} {
    %c0 = arith.constant 0 : index
    %c0_0 = arith.constant 0 : index
    %0 = vector.load %arg1[%c0, %c0_0] : memref<32x16xbf16, #tpu.memory_space<vmem>>, vector<32x16xbf16>
    %c0_1 = arith.constant 0 : index
    %c0_2 = arith.constant 0 : index
    %1 = vector.load %arg2[%c0_1, %c0_2] : memref<16x32xbf16, #tpu.memory_space<vmem>>, vector<16x32xbf16>
    %cst = arith.constant dense<0.000000e+00> : vector<32x32xf32>
    %2 = tpu.matmul %0, %1, %cst {dimension_numbers = #tpu.dot_dimension_numbers<[1], [0], [0], [1], [0, 0, 1, 1], [], []>} : vector<32x16xbf16>, vector<16x32xbf16>, vector<32x32xf32> -> vector<32x32xf32>
    %c0_3 = arith.constant 0 : index
    %c0_4 = arith.constant 0 : index
    %3 = vector.load %arg3[%c0_3, %c0_4] : memref<32x1xf32, #tpu.memory_space<vmem>>, vector<32x1xf32>
    %4 = vector.broadcast %3 : vector<32x1xf32> to vector<32x32xf32>
    %5 = arith.mulf %2, %4 : vector<32x32xf32>
    %c0_5 = arith.constant 0 : index
    %c0_6 = arith.constant 0 : index
    %6 = vector.load %arg4[%c0_5, %c0_6] : memref<32x1xf32, #tpu.memory_space<vmem>>, vector<32x1xf32>
    %7 = vector.broadcast %6 : vector<32x1xf32> to vector<32x32xf32>
    %8 = arith.addf %5, %7 : vector<32x32xf32>
    %c0_7 = arith.constant 0 : index
    %c0_8 = arith.constant 0 : index
    %9 = vector.load %arg5[%c0_7, %c0_8] : memref<32x32xf32, #tpu.memory_space<vmem>>, vector<32x32xf32>
    tpu.vector_store %arg5[%c0_7, %c0_8], %8 {strides = array<i32>} : memref<32x32xf32, #tpu.memory_space<vmem>>, vector<32x32xf32>,
    return
  }
  func.func @transform_0(%arg0: i32) -> (i32, i32) {
    %c0_i32 = arith.constant 0 : i32
    %c0_i32_0 = arith.constant 0 : i32
    %c0_i32_1 = arith.constant 0 : i32
    return %c0_i32, %c0_i32_0 : i32, i32
  }
  func.func @transform_1(%arg0: i32) -> (i32, i32) {
    %c0_i32 = arith.constant 0 : i32
    %c0_i32_0 = arith.constant 0 : i32
    return %c0_i32, %arg0 : i32, i32
  }
  func.func @transform_2(%arg0: i32) -> (i32, i32) {
    %c0_i32 = arith.constant 0 : i32
    %c0_i32_0 = arith.constant 0 : i32
    %c0_i32_1 = arith.constant 0 : i32
    return %c0_i32, %c0_i32_0 : i32, i32
  }
  func.func @transform_3(%arg0: i32) -> (i32, i32) {
    %c0_i32 = arith.constant 0 : i32
    %c0_i32_0 = arith.constant 0 : i32
    %c0_i32_1 = arith.constant 0 : i32
    return %c0_i32, %c0_i32_0 : i32, i32
  }
  func.func @transform_4(%arg0: i32) -> (i32, i32) {
    %c0_i32 = arith.constant 0 : i32
    %c0_i32_0 = arith.constant 0 : i32
    return %c0_i32, %arg0 : i32, i32
  }
}

module attributes {stable_mosaic.version = 11 : i64} {
  func.func @_mm_bn_res_kernel(%arg0: i32, %arg1: memref<32x144xi8, #tpu.memory_space<vmem>>, %arg2: memref<144x32xi8, #tpu.memory_space<vmem>>, %arg3: memref<32x1xf32, #tpu.memory_space<vmem>>, %arg4: memref<32x1xf32, #tpu.memory_space<vmem>>, %arg5: memref<32x32xf32, #tpu.memory_space<vmem>>, %arg6: memref<32x32xf32, #tpu.memory_space<vmem>>) attributes {dimension_semantics = [#tpu.dimension_semantics<parallel>], iteration_bounds = array<i64: 1>, scalar_prefetch = 0 : i64, scratch_operands = 0 : i64, tpu.core_type = #tpu.core_type<tc>, window_params = [{pipeline_mode = #tpu.pipeline_mode<synchronous>, transform_indices = @transform_0, window_bounds = array<i64: 32, 144>}, {transform_indices = @transform_1, window_bounds = array<i64: 144, 32>}, {pipeline_mode = #tpu.pipeline_mode<synchronous>, transform_indices = @transform_2, window_bounds = array<i64: 32, 1>}, {pipeline_mode = #tpu.pipeline_mode<synchronous>, transform_indices = @transform_3, window_bounds = array<i64: 32, 1>}, {transform_indices = @transform_4, window_bounds = array<i64: 32, 32>}, {transform_indices = @transform_5, window_bounds = array<i64: 32, 32>}]} {
    %c0 = arith.constant 0 : index
    %c0_0 = arith.constant 0 : index
    %0 = vector.load %arg1[%c0, %c0_0] : memref<32x144xi8, #tpu.memory_space<vmem>>, vector<32x144xi8>
    %1 = arith.sitofp %0 : vector<32x144xi8> to vector<32x144xf32>
    %2 = arith.truncf %1 : vector<32x144xf32> to vector<32x144xbf16>
    %c0_1 = arith.constant 0 : index
    %c0_2 = arith.constant 0 : index
    %3 = vector.load %arg2[%c0_1, %c0_2] : memref<144x32xi8, #tpu.memory_space<vmem>>, vector<144x32xi8>
    %4 = arith.sitofp %3 : vector<144x32xi8> to vector<144x32xf32>
    %5 = arith.truncf %4 : vector<144x32xf32> to vector<144x32xbf16>
    %cst = arith.constant dense<0.000000e+00> : vector<32x32xf32>
    %6 = tpu.matmul %2, %5, %cst {dimension_numbers = #tpu.dot_dimension_numbers<[1], [0], [0], [1], [0, 0, 1, 1], [], []>} : vector<32x144xbf16>, vector<144x32xbf16>, vector<32x32xf32> -> vector<32x32xf32>
    %c0_3 = arith.constant 0 : index
    %c0_4 = arith.constant 0 : index
    %7 = vector.load %arg3[%c0_3, %c0_4] : memref<32x1xf32, #tpu.memory_space<vmem>>, vector<32x1xf32>
    %8 = vector.broadcast %7 : vector<32x1xf32> to vector<32x32xf32>
    %9 = arith.mulf %6, %8 : vector<32x32xf32>
    %c0_5 = arith.constant 0 : index
    %c0_6 = arith.constant 0 : index
    %10 = vector.load %arg4[%c0_5, %c0_6] : memref<32x1xf32, #tpu.memory_space<vmem>>, vector<32x1xf32>
    %11 = vector.broadcast %10 : vector<32x1xf32> to vector<32x32xf32>
    %12 = arith.addf %9, %11 : vector<32x32xf32>
    %c0_7 = arith.constant 0 : index
    %c0_8 = arith.constant 0 : index
    %13 = vector.load %arg5[%c0_7, %c0_8] : memref<32x32xf32, #tpu.memory_space<vmem>>, vector<32x32xf32>
    %14 = arith.addf %12, %13 : vector<32x32xf32>
    %c0_9 = arith.constant 0 : index
    %c0_10 = arith.constant 0 : index
    %15 = vector.load %arg6[%c0_9, %c0_10] : memref<32x32xf32, #tpu.memory_space<vmem>>, vector<32x32xf32>
    tpu.vector_store %arg6[%c0_9, %c0_10], %14 {strides = array<i32>} : memref<32x32xf32, #tpu.memory_space<vmem>>, vector<32x32xf32>,
    return
  }
  func.func @transform_0(%arg0: i32) -> (i32, i32) {
    %c0_i32 = arith.constant 0 : i32
    %c0_i32_0 = arith.constant 0 : i32
    %c0_i32_1 = arith.constant 0 : i32
    return %c0_i32, %c0_i32_0 : i32, i32
  }
  func.func @transform_1(%arg0: i32) -> (i32, i32) {
    %c0_i32 = arith.constant 0 : i32
    %c0_i32_0 = arith.constant 0 : i32
    return %c0_i32, %arg0 : i32, i32
  }
  func.func @transform_2(%arg0: i32) -> (i32, i32) {
    %c0_i32 = arith.constant 0 : i32
    %c0_i32_0 = arith.constant 0 : i32
    %c0_i32_1 = arith.constant 0 : i32
    return %c0_i32, %c0_i32_0 : i32, i32
  }
  func.func @transform_3(%arg0: i32) -> (i32, i32) {
    %c0_i32 = arith.constant 0 : i32
    %c0_i32_0 = arith.constant 0 : i32
    %c0_i32_1 = arith.constant 0 : i32
    return %c0_i32, %c0_i32_0 : i32, i32
  }
  func.func @transform_4(%arg0: i32) -> (i32, i32) {
    %c0_i32 = arith.constant 0 : i32
    %c0_i32_0 = arith.constant 0 : i32
    return %c0_i32, %arg0 : i32, i32
  }
  func.func @transform_5(%arg0: i32) -> (i32, i32) {
    %c0_i32 = arith.constant 0 : i32
    %c0_i32_0 = arith.constant 0 : i32
    return %c0_i32, %arg0 : i32, i32
  }
}

module attributes {stable_mosaic.version = 11 : i64} {
  func.func @_mm_bn_kernel(%arg0: i32, %arg1: memref<8x32xbf16, #tpu.memory_space<vmem>>, %arg2: memref<32x64xbf16, #tpu.memory_space<vmem>>, %arg3: memref<1x64xf32, #tpu.memory_space<vmem>>, %arg4: memref<1x64xf32, #tpu.memory_space<vmem>>, %arg5: memref<8x64xf32, #tpu.memory_space<vmem>>) attributes {dimension_semantics = [#tpu.dimension_semantics<parallel>], iteration_bounds = array<i64: 1>, scalar_prefetch = 0 : i64, scratch_operands = 0 : i64, tpu.core_type = #tpu.core_type<tc>, window_params = [{pipeline_mode = #tpu.pipeline_mode<synchronous>, transform_indices = @transform_0, window_bounds = array<i64: 8, 32>}, {transform_indices = @transform_1, window_bounds = array<i64: 32, 64>}, {transform_indices = @transform_2, window_bounds = array<i64: 1, 64>}, {transform_indices = @transform_3, window_bounds = array<i64: 1, 64>}, {transform_indices = @transform_4, window_bounds = array<i64: 8, 64>}]} {
    %c0 = arith.constant 0 : index
    %c0_0 = arith.constant 0 : index
    %0 = vector.load %arg1[%c0, %c0_0] : memref<8x32xbf16, #tpu.memory_space<vmem>>, vector<8x32xbf16>
    %c0_1 = arith.constant 0 : index
    %c0_2 = arith.constant 0 : index
    %1 = vector.load %arg2[%c0_1, %c0_2] : memref<32x64xbf16, #tpu.memory_space<vmem>>, vector<32x64xbf16>
    %cst = arith.constant dense<0.000000e+00> : vector<8x64xf32>
    %2 = tpu.matmul %0, %1, %cst {dimension_numbers = #tpu.dot_dimension_numbers<[1], [0], [0], [1], [0, 0, 1, 1], [], []>} : vector<8x32xbf16>, vector<32x64xbf16>, vector<8x64xf32> -> vector<8x64xf32>
    %c0_3 = arith.constant 0 : index
    %c0_4 = arith.constant 0 : index
    %3 = vector.load %arg3[%c0_3, %c0_4] : memref<1x64xf32, #tpu.memory_space<vmem>>, vector<1x64xf32>
    %4 = vector.broadcast %3 : vector<1x64xf32> to vector<8x64xf32>
    %5 = arith.mulf %2, %4 : vector<8x64xf32>
    %c0_5 = arith.constant 0 : index
    %c0_6 = arith.constant 0 : index
    %6 = vector.load %arg4[%c0_5, %c0_6] : memref<1x64xf32, #tpu.memory_space<vmem>>, vector<1x64xf32>
    %7 = vector.broadcast %6 : vector<1x64xf32> to vector<8x64xf32>
    %8 = arith.addf %5, %7 : vector<8x64xf32>
    %c0_7 = arith.constant 0 : index
    %c0_8 = arith.constant 0 : index
    %9 = vector.load %arg5[%c0_7, %c0_8] : memref<8x64xf32, #tpu.memory_space<vmem>>, vector<8x64xf32>
    tpu.vector_store %arg5[%c0_7, %c0_8], %8 {strides = array<i32>} : memref<8x64xf32, #tpu.memory_space<vmem>>, vector<8x64xf32>,
    return
  }
  func.func @transform_0(%arg0: i32) -> (i32, i32) {
    %c0_i32 = arith.constant 0 : i32
    %c0_i32_0 = arith.constant 0 : i32
    %c0_i32_1 = arith.constant 0 : i32
    return %c0_i32, %c0_i32_0 : i32, i32
  }
  func.func @transform_1(%arg0: i32) -> (i32, i32) {
    %c0_i32 = arith.constant 0 : i32
    %c0_i32_0 = arith.constant 0 : i32
    return %c0_i32, %arg0 : i32, i32
  }
  func.func @transform_2(%arg0: i32) -> (i32, i32) {
    %c0_i32 = arith.constant 0 : i32
    %c0_i32_0 = arith.constant 0 : i32
    return %c0_i32, %arg0 : i32, i32
  }
  func.func @transform_3(%arg0: i32) -> (i32, i32) {
    %c0_i32 = arith.constant 0 : i32
    %c0_i32_0 = arith.constant 0 : i32
    return %c0_i32, %arg0 : i32, i32
  }
  func.func @transform_4(%arg0: i32) -> (i32, i32) {
    %c0_i32 = arith.constant 0 : i32
    %c0_i32_0 = arith.constant 0 : i32
    return %c0_i32, %arg0 : i32, i32
  }
}

module attributes {stable_mosaic.version = 11 : i64} {
  func.func @_mm_bn_res_kernel(%arg0: i32, %arg1: memref<8x288xi8, #tpu.memory_space<vmem>>, %arg2: memref<288x64xi8, #tpu.memory_space<vmem>>, %arg3: memref<1x64xf32, #tpu.memory_space<vmem>>, %arg4: memref<1x64xf32, #tpu.memory_space<vmem>>, %arg5: memref<8x64xf32, #tpu.memory_space<vmem>>, %arg6: memref<8x64xf32, #tpu.memory_space<vmem>>) attributes {dimension_semantics = [#tpu.dimension_semantics<parallel>], iteration_bounds = array<i64: 1>, scalar_prefetch = 0 : i64, scratch_operands = 0 : i64, tpu.core_type = #tpu.core_type<tc>, window_params = [{pipeline_mode = #tpu.pipeline_mode<synchronous>, transform_indices = @transform_0, window_bounds = array<i64: 8, 288>}, {transform_indices = @transform_1, window_bounds = array<i64: 288, 64>}, {transform_indices = @transform_2, window_bounds = array<i64: 1, 64>}, {transform_indices = @transform_3, window_bounds = array<i64: 1, 64>}, {transform_indices = @transform_4, window_bounds = array<i64: 8, 64>}, {transform_indices = @transform_5, window_bounds = array<i64: 8, 64>}]} {
    %c0 = arith.constant 0 : index
    %c0_0 = arith.constant 0 : index
    %0 = vector.load %arg1[%c0, %c0_0] : memref<8x288xi8, #tpu.memory_space<vmem>>, vector<8x288xi8>
    %1 = arith.sitofp %0 : vector<8x288xi8> to vector<8x288xf32>
    %2 = arith.truncf %1 : vector<8x288xf32> to vector<8x288xbf16>
    %c0_1 = arith.constant 0 : index
    %c0_2 = arith.constant 0 : index
    %3 = vector.load %arg2[%c0_1, %c0_2] : memref<288x64xi8, #tpu.memory_space<vmem>>, vector<288x64xi8>
    %4 = arith.sitofp %3 : vector<288x64xi8> to vector<288x64xf32>
    %5 = arith.truncf %4 : vector<288x64xf32> to vector<288x64xbf16>
    %cst = arith.constant dense<0.000000e+00> : vector<8x64xf32>
    %6 = tpu.matmul %2, %5, %cst {dimension_numbers = #tpu.dot_dimension_numbers<[1], [0], [0], [1], [0, 0, 1, 1], [], []>} : vector<8x288xbf16>, vector<288x64xbf16>, vector<8x64xf32> -> vector<8x64xf32>
    %c0_3 = arith.constant 0 : index
    %c0_4 = arith.constant 0 : index
    %7 = vector.load %arg3[%c0_3, %c0_4] : memref<1x64xf32, #tpu.memory_space<vmem>>, vector<1x64xf32>
    %8 = vector.broadcast %7 : vector<1x64xf32> to vector<8x64xf32>
    %9 = arith.mulf %6, %8 : vector<8x64xf32>
    %c0_5 = arith.constant 0 : index
    %c0_6 = arith.constant 0 : index
    %10 = vector.load %arg4[%c0_5, %c0_6] : memref<1x64xf32, #tpu.memory_space<vmem>>, vector<1x64xf32>
    %11 = vector.broadcast %10 : vector<1x64xf32> to vector<8x64xf32>
    %12 = arith.addf %9, %11 : vector<8x64xf32>
    %c0_7 = arith.constant 0 : index
    %c0_8 = arith.constant 0 : index
    %13 = vector.load %arg5[%c0_7, %c0_8] : memref<8x64xf32, #tpu.memory_space<vmem>>, vector<8x64xf32>
    %14 = arith.addf %12, %13 : vector<8x64xf32>
    %c0_9 = arith.constant 0 : index
    %c0_10 = arith.constant 0 : index
    %15 = vector.load %arg6[%c0_9, %c0_10] : memref<8x64xf32, #tpu.memory_space<vmem>>, vector<8x64xf32>
    tpu.vector_store %arg6[%c0_9, %c0_10], %14 {strides = array<i32>} : memref<8x64xf32, #tpu.memory_space<vmem>>, vector<8x64xf32>,
    return
  }
  func.func @transform_0(%arg0: i32) -> (i32, i32) {
    %c0_i32 = arith.constant 0 : i32
    %c0_i32_0 = arith.constant 0 : i32
    %c0_i32_1 = arith.constant 0 : i32
    return %c0_i32, %c0_i32_0 : i32, i32
  }
  func.func @transform_1(%arg0: i32) -> (i32, i32) {
    %c0_i32 = arith.constant 0 : i32
    %c0_i32_0 = arith.constant 0 : i32
    return %c0_i32, %arg0 : i32, i32
  }
  func.func @transform_2(%arg0: i32) -> (i32, i32) {
    %c0_i32 = arith.constant 0 : i32
    %c0_i32_0 = arith.constant 0 : i32
    return %c0_i32, %arg0 : i32, i32
  }
  func.func @transform_3(%arg0: i32) -> (i32, i32) {
    %c0_i32 = arith.constant 0 : i32
    %c0_i32_0 = arith.constant 0 : i32
    return %c0_i32, %arg0 : i32, i32
  }
  func.func @transform_4(%arg0: i32) -> (i32, i32) {
    %c0_i32 = arith.constant 0 : i32
    %c0_i32_0 = arith.constant 0 : i32
    return %c0_i32, %arg0 : i32, i32
  }
  func.func @transform_5(%arg0: i32) -> (i32, i32) {
    %c0_i32 = arith.constant 0 : i32
    %c0_i32_0 = arith.constant 0 : i32
    return %c0_i32, %arg0 : i32, i32
  }
}

</mosaic_0001>

<llo_original>
// kernel: _lambda_.6
$region0: #{_lambda_.6}
  #allocation0 [shape = 'u32[]', space=smem, size = 0x4, offset = 0x4, fixed_abs, tag = 'smem constant byte address 0x4 - core index']
  #allocation1 [shape = 'u32[72,128]{1,0:T(1,128)}', space=vmem, size = 0x9000, scoped, tag = 'internal scratch']
  %s0 = inlined_call_operand.vmem [shape: bf16[16,27], index: 0, kind: input, shape index: {}]
  %s1 = inlined_call_operand.vmem [shape: bf16[27,512], index: 1, kind: input, shape index: {}]
  %s2 = inlined_call_operand.vmem [shape: f32[16,1], index: 2, kind: input, shape index: {}]
  %s3 = inlined_call_operand.vmem [shape: f32[16,1], index: 3, kind: input, shape index: {}]
  %s4 = inlined_call_operand.vmem [shape: f32[16,512], index: 4, kind: output, shape index: {}]
  %s5 = sld [smem:[#allocation0]]
  $region106: #{_lambda_.6} parent=0
    _
  %s7 = ssub.s32 1, %s5
  %s8 = scalar_select 0, %s7, %s5
  $region1: #{_lambda_.6} parent=0
    #allocation2 [shape = 'u8[32768]{0}', space=vmem, size = 0x8000, scoped, tag = 'input window, operand 1']
    #allocation3 [shape = 'u8[32768]{0}', space=vmem, size = 0x8000, scoped, tag = 'output window, operand 0']
    loop: start=0, step=1, limit=4
    $region2: #{_lambda_.6} parent=1 // loop_pre_header
      _
    $region3: #{_lambda_.6} parent=1 // loop_header
      %s10 = sphi 0, %s14
      %p11 = scmp.ge.s32.totalorder %s10, 4
      %s18 = sphi 0, %s18
      %s20 = sphi 0, %s18
      %s21 = sphi 0, %s20
      %s35 = sphi 0, %s21
      %s41 = sphi 0, %s43
      %s44 = sphi 0, %s41
      %s45 = sphi 0, %s44
      %s61 = sphi 0, %s45
      %s65 = sphi 0, %s65
      %s67 = sphi 0, %s65
      %s68 = sphi 0, %s67
      %s82 = sphi 0, %s68
      %s86 = sphi 0, %s86
      %s88 = sphi 0, %s86
      %s89 = sphi 0, %s88
      %s103 = sphi 0, %s89
      %s109 = sphi 0, %s111
      %s112 = sphi 0, %s109
      %s113 = sphi 0, %s112
      %s129 = sphi 0, %s113
    $region4: #{_lambda_.6} parent=1 // loop_header_branch
      %13 = sbr.rel (%p11) target = $region8
    $region5: #{_lambda_.6} parent=1 // loop_body
      %s15 = ssub.s32 %s10, 1
      %s16 = ssub.s32 %s10, 2
      %s17 = sadd.s32 %s10, 1
      %s19 = sadd.s32 %s18, 1
      %p22 = scmp.eq.s32.totalorder %s10, 1
      %p23 = scmp.ne.s32.totalorder %s18, %s20
      %p24 = scmp.eq.s32.totalorder %s10, 0
      %p25 = por %p23, %p24
      %p26 = scmp.ne.s32.totalorder %s18, %s20
      %p27 = scmp.eq.s32.totalorder %s15, 1
      %p28 = por %p26, %p27
      %p29 = scmp.ne.s32.totalorder %s20, %s21
      %p30 = scmp.eq.s32.totalorder %s15, 0
      %p31 = por %p29, %p30
      %p32 = scmp.ne.s32.totalorder %s20, %s21
      %p33 = scmp.eq.s32.totalorder %s16, 1
      %p34 = por %p32, %p33
      %p36 = scmp.ne.s32.totalorder %s21, %s35
      %p37 = scmp.eq.s32.totalorder %s16, 0
      %p38 = por %p36, %p37
      %s39 = ssub.s32 %s10, %s17
      %p40 = scmp.eq.s32.totalorder %s39, 0
      %s42 = sadd.s32 %s41, 1
      %s43 = scalar_select %p40, %s41, %s42
      %p46 = pneg %p40
      %p47 = scmp.eq.s32.totalorder %s10, 1
      %p48 = por %p46, %p47
      %p49 = scmp.ne.s32.totalorder %s41, %s44
      %p50 = scmp.eq.s32.totalorder %s10, 0
      %p51 = por %p49, %p50
      %p52 = scmp.ne.s32.totalorder %s41, %s44
      %p53 = scmp.eq.s32.totalorder %s15, 1
      %p54 = por %p52, %p53
      %p55 = scmp.ne.s32.totalorder %s44, %s45
      %p56 = scmp.eq.s32.totalorder %s15, 0
      %p57 = por %p55, %p56
      %p58 = scmp.ne.s32.totalorder %s44, %s45
      %p59 = scmp.eq.s32.totalorder %s16, 1
      %p60 = por %p58, %p59
      %p62 = scmp.ne.s32.totalorder %s45, %s61
      %p63 = scmp.eq.s32.totalorder %s16, 0
      %p64 = por %p62, %p63
      %s66 = sadd.s32 %s65, 1
      %p69 = scmp.eq.s32.totalorder %s10, 1
      %p70 = scmp.ne.s32.totalorder %s65, %s67
      %p71 = scmp.eq.s32.totalorder %s10, 0
      %p72 = por %p70, %p71
      %p73 = scmp.ne.s32.totalorder %s65, %s67
      %p74 = scmp.eq.s32.totalorder %s15, 1
      %p75 = por %p73, %p74
      %p76 = scmp.ne.s32.totalorder %s67, %s68
      %p77 = scmp.eq.s32.totalorder %s15, 0
      %p78 = por %p76, %p77
      %p79 = scmp.ne.s32.totalorder %s67, %s68
      %p80 = scmp.eq.s32.totalorder %s16, 1
      %p81 = por %p79, %p80
      %p83 = scmp.ne.s32.totalorder %s68, %s82
      %p84 = scmp.eq.s32.totalorder %s16, 0
      %p85 = por %p83, %p84
      %s87 = sadd.s32 %s86, 1
      %p90 = scmp.eq.s32.totalorder %s10, 1
      %p91 = scmp.ne.s32.totalorder %s86, %s88
      %p92 = scmp.eq.s32.totalorder %s10, 0
      %p93 = por %p91, %p92
      %p94 = scmp.ne.s32.totalorder %s86, %s88
      %p95 = scmp.eq.s32.totalorder %s15, 1
      %p96 = por %p94, %p95
      %p97 = scmp.ne.s32.totalorder %s88, %s89
      %p98 = scmp.eq.s32.totalorder %s15, 0
      %p99 = por %p97, %p98
      %p100 = scmp.ne.s32.totalorder %s88, %s89
      %p101 = scmp.eq.s32.totalorder %s16, 1
      %p102 = por %p100, %p101
      %p104 = scmp.ne.s32.totalorder %s89, %s103
      %p105 = scmp.eq.s32.totalorder %s16, 0
      %p106 = por %p104, %p105
      %s107 = ssub.s32 %s10, %s17
      %p108 = scmp.eq.s32.totalorder %s107, 0
      %s110 = sadd.s32 %s109, 1
      %s111 = scalar_select %p108, %s109, %s110
      %p114 = pneg %p108
      %p115 = scmp.eq.s32.totalorder %s10, 1
      %p116 = por %p114, %p115
      %p117 = scmp.ne.s32.totalorder %s109, %s112
      %p118 = scmp.eq.s32.totalorder %s10, 0
      %p119 = por %p117, %p118
      %p120 = scmp.ne.s32.totalorder %s109, %s112
      %p121 = scmp.eq.s32.totalorder %s15, 1
      %p122 = por %p120, %p121
      %p123 = scmp.ne.s32.totalorder %s112, %s113
      %p124 = scmp.eq.s32.totalorder %s15, 0
      %p125 = por %p123, %p124
      %p126 = scmp.ne.s32.totalorder %s112, %s113
      %p127 = scmp.eq.s32.totalorder %s16, 1
      %p128 = por %p126, %p127
      %p130 = scmp.ne.s32.totalorder %s113, %s129
      %p131 = scmp.eq.s32.totalorder %s16, 0
      %p132 = por %p130, %p131
      %p133 = scmp.le.s32.totalorder 1, %s10
      %p134 = scmp.lt.s32.totalorder %s10, 3
      %p135 = pnand %p133, %p134
      %p136 = pneg %p135
      // Predicated region
      $region9: #{_lambda_.6} parent=5 // pred_check
        _
      $region10: #{_lambda_.6} parent=5 // pred_check_branch
        %138 = sbr.rel (%p135) target = $region12
      $region11: #{_lambda_.6} parent=5 // pred_region
        %s139 = ssub.s32 %s10, 1
        // Predicated region
        $region13: #{_lambda_.6} parent=11 // pred_check
          %p140 = pneg %p31
        $region14: #{_lambda_.6} parent=11 // pred_check_branch
          %142 = sbr.rel (%p140) target = $region16
        $region15: #{_lambda_.6} parent=11 // pred_region
          _
        $region16: #{_lambda_.6} parent=11 // pred_fallthru
          _
        // Predicated region
        $region17: #{_lambda_.6} parent=11 // pred_check
          %p143 = pneg %p78
        $region18: #{_lambda_.6} parent=11 // pred_check_branch
          %145 = sbr.rel (%p143) target = $region20
        $region19: #{_lambda_.6} parent=11 // pred_region
          _
        $region20: #{_lambda_.6} parent=11 // pred_fallthru
          _
        // Predicated region
        $region21: #{_lambda_.6} parent=11 // pred_check
          %p146 = pneg %p99
        $region22: #{_lambda_.6} parent=11 // pred_check_branch
          %148 = sbr.rel (%p146) target = $region24
        $region23: #{_lambda_.6} parent=11 // pred_region
          _
        $region24: #{_lambda_.6} parent=11 // pred_fallthru
          _
      $region12: #{_lambda_.6} parent=5 // pred_fallthru
        _
      %p149 = scmp.lt.s32.totalorder %s10, 2
      // Predicated region
      $region25: #{_lambda_.6} parent=5 // pred_check
        %p150 = pneg %p149
      $region26: #{_lambda_.6} parent=5 // pred_check_branch
        %152 = sbr.rel (%p150) target = $region28
      $region27: #{_lambda_.6} parent=5 // pred_region
        // Predicated region
        $region29: #{_lambda_.6} parent=27 // pred_check
          %p153 = pneg %p51
        $region30: #{_lambda_.6} parent=27 // pred_check_branch
          %155 = sbr.rel (%p153) target = $region32
        $region31: #{_lambda_.6} parent=27 // pred_region
          %s156 = sand.u32 %s41, 1
          %s157 = sand.u32 %s41, 1
          %s158 = smul.addr %s157, 32
          %s159 = scalar_lea.vmem [#allocation2], %s158
          %s160 = smul.u32 2, %s10
          %s161 = smul.addr %s160, 4
          %s162 = scalar_lea.vmem %s1, %s161
          // Predicated region
          $region33: #{_lambda_.6} parent=31 // pred_check
            _
          $region34: #{_lambda_.6} parent=31 // pred_check_branch
            %164 = sbr.rel (0) target = $region36
          $region35: #{_lambda_.6} parent=31 // pred_region
            // Predicated region
            $region37: #{_lambda_.6} parent=35 // pred_check
              _
            $region38: #{_lambda_.6} parent=35 // pred_check_branch
              %166 = sbr.rel (0) target = $region40
            $region39: #{_lambda_.6} parent=35 // pred_region
              // Predicated region
              $region52: #{_lambda_.6} parent=39 // pred_check
                _
              $region53: #{_lambda_.6} parent=39 // pred_check_branch
                %188 = sbr.rel (0) target = $region55
              $region54: #{_lambda_.6} parent=39 // pred_region
                loop: start=0, step=1, limit=1
                $region56: #{_lambda_.6} parent=54 // loop_pre_header
                  _
                $region57: #{_lambda_.6} parent=54 // loop_header
                  %s190 = sphi 0, %s194
                  %p191 = scmp.ge.s32.totalorder %s190, 1
                  %s195 = sphi %s162, %s162
                  %s196 = sphi %s159, %s159
                $region58: #{_lambda_.6} parent=54 // loop_header_branch
                  %193 = sbr.rel (%p191) target = $region62
                $region59: #{_lambda_.6} parent=54 // loop_body
                  %v197 = vld [vmem:[%s195] sm:$0xff]
                  %198 = vst [vmem:[%s196] sm:$0xff] %v197
                  %v199 = vld [vmem:[%s195 + $0x10] sm:$0xff]
                  %200 = vst [vmem:[%s196 + $0x8] sm:$0xff] %v199
                  %v201 = vld [vmem:[%s195 + $0x20] sm:$0xff]
                  %202 = vst [vmem:[%s196 + $0x10] sm:$0xff] %v201
                  %v203 = vld [vmem:[%s195 + $0x30] sm:$0xff]
                  %204 = vst [vmem:[%s196 + $0x18] sm:$0xff] %v203
                $region60: #{_lambda_.6} parent=54 // loop_footer
                  %s194 = sadd.s32 1, %s190
                $region61: #{_lambda_.6} parent=54 // loop_footer_branch
                  %189 = sbr.rel target = $region57
                $region62: #{_lambda_.6} parent=54 // loop_exit
                  _
              $region55: #{_lambda_.6} parent=39 // pred_fallthru
                _
              // Predicated region
              $region63: #{_lambda_.6} parent=39 // pred_check
                _
              $region64: #{_lambda_.6} parent=39 // pred_check_branch
                %206 = sbr.rel target = $region66
              $region65: #{_lambda_.6} parent=39 // pred_region
                _
              $region66: #{_lambda_.6} parent=39 // pred_fallthru
                _
            $region40: #{_lambda_.6} parent=35 // pred_fallthru
              _
            // Predicated region
            $region41: #{_lambda_.6} parent=35 // pred_check
              _
            $region42: #{_lambda_.6} parent=35 // pred_check_branch
              %168 = sbr.rel target = $region44
            $region43: #{_lambda_.6} parent=35 // pred_region
              %s170 = ssub.s32 256, 1
              loop: start=0, step=1, limit=1
              $region45: #{_lambda_.6} parent=43 // loop_pre_header
                _
              $region46: #{_lambda_.6} parent=43 // loop_header
                %s172 = sphi 0, %s176
                %p173 = scmp.ge.s32.totalorder %s172, 1
                %s177 = sphi %s162, %s162
                %s178 = sphi %s159, %s159
              $region47: #{_lambda_.6} parent=43 // loop_header_branch
                %175 = sbr.rel (%p173) target = $region51
              $region48: #{_lambda_.6} parent=43 // loop_body
                %v179 = vld [vmem:[%s177] sm:%s170]
                %180 = vst [vmem:[%s178] sm:%s170] %v179
                %v181 = vld [vmem:[%s177 + $0x10] sm:%s170]
                %182 = vst [vmem:[%s178 + $0x8] sm:%s170] %v181
                %v183 = vld [vmem:[%s177 + $0x20] sm:%s170]
                %184 = vst [vmem:[%s178 + $0x10] sm:%s170] %v183
                %v185 = vld [vmem:[%s177 + $0x30] sm:%s170]
                %186 = vst [vmem:[%s178 + $0x18] sm:%s170] %v185
              $region49: #{_lambda_.6} parent=43 // loop_footer
                %s176 = sadd.s32 1, %s172
              $region50: #{_lambda_.6} parent=43 // loop_footer_branch
                %171 = sbr.rel target = $region46
              $region51: #{_lambda_.6} parent=43 // loop_exit
                _
            $region44: #{_lambda_.6} parent=35 // pred_fallthru
              _
          $region36: #{_lambda_.6} parent=31 // pred_fallthru
            _
          %207 = vnop
        $region32: #{_lambda_.6} parent=27 // pred_fallthru
          _
      $region28: #{_lambda_.6} parent=5 // pred_fallthru
        _
      %p208 = scmp.le.s32.totalorder 1, %s10
      %p209 = scmp.lt.s32.totalorder %s10, 3
      %p210 = pnand %p208, %p209
      %p211 = pneg %p210
      // Predicated region
      $region67: #{_lambda_.6} parent=5 // pred_check
        _
      $region68: #{_lambda_.6} parent=5 // pred_check_branch
        %213 = sbr.rel (%p210) target = $region70
      $region69: #{_lambda_.6} parent=5 // pred_region
        %s214 = ssub.s32 %s10, 1
        %s215 = sand.u32 %s44, 1
        %s216 = sand.u32 %s44, 1
        %s217 = smul.addr %s216, 32
        %s218 = scalar_lea.vmem [#allocation2], %s217
        // Predicated region
        $region71: #{_lambda_.6} parent=69 // pred_check
          %p219 = pneg %p57
        $region72: #{_lambda_.6} parent=69 // pred_check_branch
          %221 = sbr.rel (%p219) target = $region74
        $region73: #{_lambda_.6} parent=69 // pred_region
          _
        $region74: #{_lambda_.6} parent=69 // pred_fallthru
          _
        %p222 = pneg %p31
        %p223 = pneg %p28
        %s224 = sand.u32 %s44, 1
        %s225 = sand.u32 %s44, 1
        %s226 = smul.addr %s225, 32
        %s227 = scalar_lea.vmem [#allocation2], %s226
        %p228 = pneg %p57
        %p229 = pneg %p54
        %p230 = pneg %p78
        %p231 = pneg %p75
        %p232 = pneg %p99
        %p233 = pneg %p96
        %p234 = pneg %p125
        %p235 = pneg %p122
        %s236 = sand.u32 %s112, 1
        %s237 = sand.u32 %s112, 1
        %s238 = smul.addr %s237, 32
        %s239 = scalar_lea.vmem [#allocation3], %s238
        %s240 = smul.u32 2, %s15
        %s241 = smul.u32 2, %s15
        %v243 = vld [vmem:[%s0] sm:$0xf]
        %v244 = vld [vmem:[%s0 + $0x4] sm:$0xf]
        %v245 = vld [vmem:[%s218] sm:$0xff]
        %v246 = vld [vmem:[%s218 + $0x8] sm:$0xff]
        %v247 = vld [vmem:[%s218 + $0x10] sm:$0xff]
        %v248 = vld [vmem:[%s218 + $0x18] sm:$0x33]
        %v251 = vunpack.c.l.b16 %v243
        %v252 = vunpack.c.l.b16 %v244
        %v253 = vpack.c.b16 %v252, %v251
        %v258 = vunpack.c.l.b16 %v245
        %v259 = vunpack.c.h.b16 %v245
        %v260 = vunpack.c.l.b16 %v246
        %v261 = vunpack.c.h.b16 %v246
        %v262 = vunpack.c.l.b16 %v247
        %v263 = vunpack.c.h.b16 %v247
        %v264 = vunpack.c.l.b16 %v248
        %v265 = vunpack.c.h.b16 %v248
        %v266 = vpack.c.b16 %v260, %v258
        %v267 = vpack.c.b16 %v261, %v259
        %v268 = vpack.c.b16 %v264, %v262
        %v269 = vpack.c.b16 %v265, %v263
        %vm272 = vcmask 220160
        %v274 = vsel %vm272, %v253, 0
        %vm276 = vcmask 1044480
        %vm277 = vcmask 1045504
        %v278 = vsel %vm276, 4294967295, 65535
        %v279 = vsel %vm277, %v278, 0
        %v281 = vand.u32 %v268, %v279
        %v284 = vand.u32 %v269, %v279
        %286 = vmatpush.bf16.msra.mxu0 0
        %287 = vmatpush.bf16.msra.mxu0 0
        %288 = vmatpush.bf16.msra.mxu0 0
        %289 = vmatpush.bf16.msra.mxu0 0
        %290 = vmatpush.bf16.msra.mxu0 0
        %291 = vmatpush.bf16.msra.mxu0 0
        %292 = vmatpush.bf16.msra.mxu0 %v281
        %293 = vmatpush.bf16.msra.mxu0 %v266
        %294 = vmatmul.bf16.gmra.mxu0 %v274
        %v295 = vpop.f32.mrf.mxu0
        %v296 = vadd.f32 0.0, %v295
        %v297 = vpop.f32.mrf.mxu0
        %v298 = vadd.f32 0.0, %v297
        %299 = vdwg.mxu0
        %300 = vmatpush.bf16.msra.mxu0 0
        %301 = vmatpush.bf16.msra.mxu0 0
        %302 = vmatpush.bf16.msra.mxu0 0
        %303 = vmatpush.bf16.msra.mxu0 0
        %304 = vmatpush.bf16.msra.mxu0 0
        %305 = vmatpush.bf16.msra.mxu0 0
        %306 = vmatpush.bf16.msra.mxu0 %v284
        %307 = vmatpush.bf16.msra.mxu0 %v267
        %308 = vmatmul.bf16.gmra.mxu0 %v274
        %v309 = vpop.f32.mrf.mxu0
        %v310 = vadd.f32 0.0, %v309
        %v311 = vpop.f32.mrf.mxu0
        %v312 = vadd.f32 0.0, %v311
        %313 = vdwg.mxu0
        %v314 = vld [vmem:[%s2] sm:$0xff]
        %v315 = vld [vmem:[%s2 + $0x8] sm:$0xff]
        %317 = vset.pattern.permute.xlu0 0
        %318 = vperm.xlu0 %317, %v314
        %v319 = vpop.permute.xlu0 %318
        %322 = vset.pattern.permute.xlu0 0
        %323 = vperm.xlu0 %322, %v315
        %v324 = vpop.permute.xlu0 %323
        %v326 = vmul.f32 %v296, %v319
        %v327 = vmul.f32 %v310, %v319
        %v328 = vmul.f32 %v298, %v324
        %v329 = vmul.f32 %v312, %v324
        %v330 = vld [vmem:[%s3] sm:$0xff]
        %v331 = vld [vmem:[%s3 + $0x8] sm:$0xff]
        %333 = vset.pattern.permute.xlu0 0
        %334 = vperm.xlu0 %333, %v330
        %v335 = vpop.permute.xlu0 %334
        %338 = vset.pattern.permute.xlu0 0
        %339 = vperm.xlu0 %338, %v331
        %v340 = vpop.permute.xlu0 %339
        %v342 = vadd.f32 %v326, %v335
        %v343 = vadd.f32 %v327, %v335
        %v344 = vadd.f32 %v328, %v340
        %v345 = vadd.f32 %v329, %v340
        %346 = vst [vmem:[%s239] sm:$0xff] %v342
        %347 = vst [vmem:[%s239 + $0x8] sm:$0xff] %v343
        %348 = vst [vmem:[%s239 + $0x10] sm:$0xff] %v344
        %349 = vst [vmem:[%s239 + $0x18] sm:$0xff] %v345
        %s350 = sand.u32 %s112, 1
        %s351 = sand.u32 %s112, 1
        %s352 = smul.addr %s351, 32
        %s353 = scalar_lea.vmem [#allocation3], %s352
        // Predicated region
        $region75: #{_lambda_.6} parent=69 // pred_check
          %p354 = pneg %p122
        $region76: #{_lambda_.6} parent=69 // pred_check_branch
          %356 = sbr.rel (%p354) target = $region78
        $region77: #{_lambda_.6} parent=69 // pred_region
          %s357 = smul.u32 2, %s15
          %s358 = smul.addr %s357, 8
          %s359 = scalar_lea.vmem %s4, %s358
          // Predicated region
          $region79: #{_lambda_.6} parent=77 // pred_check
            _
          $region80: #{_lambda_.6} parent=77 // pred_check_branch
            %361 = sbr.rel (0) target = $region82
          $region81: #{_lambda_.6} parent=77 // pred_region
            // Predicated region
            $region83: #{_lambda_.6} parent=81 // pred_check
              _
            $region84: #{_lambda_.6} parent=81 // pred_check_branch
              %363 = sbr.rel (0) target = $region86
            $region85: #{_lambda_.6} parent=81 // pred_region
              loop: start=0, step=1, limit=1
              $region87: #{_lambda_.6} parent=85 // loop_pre_header
                _
              $region88: #{_lambda_.6} parent=85 // loop_header
                %s365 = sphi 0, %s369
                %p366 = scmp.ge.s32.totalorder %s365, 1
                %s370 = sphi %s353, %s353
                %s371 = sphi %s359, %s359
              $region89: #{_lambda_.6} parent=85 // loop_header_branch
                %368 = sbr.rel (%p366) target = $region93
              $region90: #{_lambda_.6} parent=85 // loop_body
                %v372 = vld [vmem:[%s370] sm:$0xff]
                %373 = vst [vmem:[%s371] sm:$0xff] %v372
                %v374 = vld [vmem:[%s370 + $0x8] sm:$0xff]
                %375 = vst [vmem:[%s371 + $0x8] sm:$0xff] %v374
                %v376 = vld [vmem:[%s370 + $0x10] sm:$0xff]
                %377 = vst [vmem:[%s371 + $0x20] sm:$0xff] %v376
                %v378 = vld [vmem:[%s370 + $0x18] sm:$0xff]
                %379 = vst [vmem:[%s371 + $0x28] sm:$0xff] %v378
              $region91: #{_lambda_.6} parent=85 // loop_footer
                %s369 = sadd.s32 1, %s365
              $region92: #{_lambda_.6} parent=85 // loop_footer_branch
                %364 = sbr.rel target = $region88
              $region93: #{_lambda_.6} parent=85 // loop_exit
                _
            $region86: #{_lambda_.6} parent=81 // pred_fallthru
              _
            // Predicated region
            $region94: #{_lambda_.6} parent=81 // pred_check
              _
            $region95: #{_lambda_.6} parent=81 // pred_check_branch
              %381 = sbr.rel target = $region97
            $region96: #{_lambda_.6} parent=81 // pred_region
              _
            $region97: #{_lambda_.6} parent=81 // pred_fallthru
              _
          $region82: #{_lambda_.6} parent=77 // pred_fallthru
            _
          %382 = vnop
        $region78: #{_lambda_.6} parent=69 // pred_fallthru
          _
      $region70: #{_lambda_.6} parent=5 // pred_fallthru
        _
      %p383 = scmp.le.s32.totalorder 2, %s10
      // Predicated region
      $region98: #{_lambda_.6} parent=5 // pred_check
        %p384 = pneg %p383
      $region99: #{_lambda_.6} parent=5 // pred_check_branch
        %386 = sbr.rel (%p384) target = $region101
      $region100: #{_lambda_.6} parent=5 // pred_region
        %s387 = ssub.s32 %s10, 2
        // Predicated region
        $region102: #{_lambda_.6} parent=100 // pred_check
          %p388 = pneg %p128
        $region103: #{_lambda_.6} parent=100 // pred_check_branch
          %390 = sbr.rel (%p388) target = $region105
        $region104: #{_lambda_.6} parent=100 // pred_region
          %s391 = sand.u32 %s113, 1
          %s392 = sand.u32 %s113, 1
          %s393 = smul.addr %s392, 32
          %s394 = scalar_lea.vmem [#allocation3], %s393
        $region105: #{_lambda_.6} parent=100 // pred_fallthru
          _
      $region101: #{_lambda_.6} parent=5 // pred_fallthru
        _
    $region6: #{_lambda_.6} parent=1 // loop_footer
      %s14 = sadd.s32 1, %s10
    $region7: #{_lambda_.6} parent=1 // loop_footer_branch
      %9 = sbr.rel target = $region3
    $region8: #{_lambda_.6} parent=1 // loop_exit
      _

// kernel: _lambda_.7
$region0: #{_lambda_.7}
  #allocation0 [shape = 'u32[]', space=smem, size = 0x4, offset = 0x4, fixed_abs, tag = 'smem constant byte address 0x4 - core index']
  #allocation1 [shape = 'u32[72,128]{1,0:T(1,128)}', space=vmem, size = 0x9000, scoped, tag = 'internal scratch']
  %s0 = inlined_call_operand.vmem [shape: s8[16,144], index: 0, kind: input, shape index: {}]
  %s1 = inlined_call_operand.vmem [shape: s8[144,128], index: 1, kind: input, shape index: {}]
  %s2 = inlined_call_operand.vmem [shape: f32[16,1], index: 2, kind: input, shape index: {}]
  %s3 = inlined_call_operand.vmem [shape: f32[16,1], index: 3, kind: input, shape index: {}]
  %s4 = inlined_call_operand.vmem [shape: f32[16,128], index: 4, kind: input, shape index: {}, may-alias: {4,5}]
  %s5 = inlined_call_operand.vmem [shape: f32[16,128], index: 5, kind: output, shape index: {}, may-alias: {4,5}]
  %s6 = sld [smem:[#allocation0]]
  $region30: #{_lambda_.7} parent=0
    _
  %s8 = ssub.s32 1, %s6
  %s9 = scalar_select 0, %s8, %s6
  // Predicated region
  $region2: #{_lambda_.7} parent=0 // pred_check
    _
  $region3: #{_lambda_.7} parent=0 // pred_check_branch
    %11 = sbr.rel (0) target = $region5
  $region4: #{_lambda_.7} parent=0 // pred_region
    _
  $region5: #{_lambda_.7} parent=0 // pred_fallthru
    _
  // Predicated region
  $region6: #{_lambda_.7} parent=0 // pred_check
    _
  $region7: #{_lambda_.7} parent=0 // pred_check_branch
    %13 = sbr.rel (0) target = $region9
  $region8: #{_lambda_.7} parent=0 // pred_region
    _
  $region9: #{_lambda_.7} parent=0 // pred_fallthru
    _
  // Predicated region
  $region10: #{_lambda_.7} parent=0 // pred_check
    _
  $region11: #{_lambda_.7} parent=0 // pred_check_branch
    %15 = sbr.rel (0) target = $region13
  $region12: #{_lambda_.7} parent=0 // pred_region
    _
  $region13: #{_lambda_.7} parent=0 // pred_fallthru
    _
  // Predicated region
  $region14: #{_lambda_.7} parent=0 // pred_check
    _
  $region15: #{_lambda_.7} parent=0 // pred_check_branch
    %17 = sbr.rel (0) target = $region17
  $region16: #{_lambda_.7} parent=0 // pred_region
    _
  $region17: #{_lambda_.7} parent=0 // pred_fallthru
    _
  // Predicated region
  $region18: #{_lambda_.7} parent=0 // pred_check
    _
  $region19: #{_lambda_.7} parent=0 // pred_check_branch
    %19 = sbr.rel (0) target = $region21
  $region20: #{_lambda_.7} parent=0 // pred_region
    _
  $region21: #{_lambda_.7} parent=0 // pred_fallthru
    _
  %v21 = vld [vmem:[%s0] sm:$0xf]
  %v22 = vld [vmem:[%s0 + $0x4] sm:$0xf]
  %v23 = vunpack.c.0.s8 %v21
  %v24 = vunpack.c.1.s8 %v21
  %v25 = vunpack.c.0.s8 %v22
  %v26 = vunpack.c.1.s8 %v22
  %v27 = vcvt.s32.f32 %v23
  %v28 = vcvt.s32.f32 %v24
  %v29 = vcvt.s32.f32 %v25
  %v30 = vcvt.s32.f32 %v26
  %v31 = vpack.c.bf16 %v29, %v27
  %v32 = vpack.c.bf16 %v30, %v28
  %v33 = vld [vmem:[%s1] sm:$0x3]
  %v34 = vld [vmem:[%s1 + $0x2] sm:$0x3]
  %v35 = vld [vmem:[%s1 + $0x4] sm:$0x3]
  %v36 = vld [vmem:[%s1 + $0x6] sm:$0x3]
  %v37 = vld [vmem:[%s1 + $0x8] sm:$0x3]
  %v38 = vld [vmem:[%s1 + $0xa] sm:$0x3]
  %v39 = vld [vmem:[%s1 + $0xc] sm:$0x3]
  %v40 = vld [vmem:[%s1 + $0xe] sm:$0x3]
  %v41 = vld [vmem:[%s1 + $0x10] sm:$0x3]
  %v42 = vld [vmem:[%s1 + $0x12] sm:$0x3]
  %v43 = vld [vmem:[%s1 + $0x14] sm:$0x3]
  %v44 = vld [vmem:[%s1 + $0x16] sm:$0x3]
  %v45 = vld [vmem:[%s1 + $0x18] sm:$0x3]
  %v46 = vld [vmem:[%s1 + $0x1a] sm:$0x3]
  %v47 = vld [vmem:[%s1 + $0x1c] sm:$0x3]
  %v48 = vld [vmem:[%s1 + $0x1e] sm:$0x3]
  %v49 = vld [vmem:[%s1 + $0x20] sm:$0x3]
  %v50 = vld [vmem:[%s1 + $0x22] sm:$0x3]
  %v51 = vunpack.c.0.s8 %v33
  %v52 = vunpack.c.0.s8 %v34
  %v53 = vunpack.c.0.s8 %v35
  %v54 = vunpack.c.0.s8 %v36
  %v55 = vunpack.c.0.s8 %v37
  %v56 = vunpack.c.0.s8 %v38
  %v57 = vunpack.c.0.s8 %v39
  %v58 = vunpack.c.0.s8 %v40
  %v59 = vunpack.c.0.s8 %v41
  %v60 = vunpack.c.0.s8 %v42
  %v61 = vunpack.c.0.s8 %v43
  %v62 = vunpack.c.0.s8 %v44
  %v63 = vunpack.c.0.s8 %v45
  %v64 = vunpack.c.0.s8 %v46
  %v65 = vunpack.c.0.s8 %v47
  %v66 = vunpack.c.0.s8 %v48
  %v67 = vunpack.c.0.s8 %v49
  %v68 = vunpack.c.0.s8 %v50
  %v69 = vcvt.s32.f32 %v51
  %v70 = vcvt.s32.f32 %v52
  %v71 = vcvt.s32.f32 %v53
  %v72 = vcvt.s32.f32 %v54
  %v73 = vcvt.s32.f32 %v55
  %v74 = vcvt.s32.f32 %v56
  %v75 = vcvt.s32.f32 %v57
  %v76 = vcvt.s32.f32 %v58
  %v77 = vcvt.s32.f32 %v59
  %v78 = vcvt.s32.f32 %v60
  %v79 = vcvt.s32.f32 %v61
  %v80 = vcvt.s32.f32 %v62
  %v81 = vcvt.s32.f32 %v63
  %v82 = vcvt.s32.f32 %v64
  %v83 = vcvt.s32.f32 %v65
  %v84 = vcvt.s32.f32 %v66
  %v85 = vcvt.s32.f32 %v67
  %v86 = vcvt.s32.f32 %v68
  %v87 = vpack.c.bf16 %v70, %v69
  %v88 = vpack.c.bf16 %v72, %v71
  %v89 = vpack.c.bf16 %v74, %v73
  %v90 = vpack.c.bf16 %v76, %v75
  %v91 = vpack.c.bf16 %v78, %v77
  %v92 = vpack.c.bf16 %v80, %v79
  %v93 = vpack.c.bf16 %v82, %v81
  %v94 = vpack.c.bf16 %v84, %v83
  %v95 = vpack.c.bf16 %v86, %v85
  %vm96 = vcmask 130048
  %v98 = vsel %vm96, %v32, 0
  %100 = vmatpush.bf16.msra.mxu0 %v94
  %101 = vmatpush.bf16.msra.mxu0 %v93
  %102 = vmatpush.bf16.msra.mxu0 %v92
  %103 = vmatpush.bf16.msra.mxu0 %v91
  %104 = vmatpush.bf16.msra.mxu0 %v90
  %105 = vmatpush.bf16.msra.mxu0 %v89
  %106 = vmatpush.bf16.msra.mxu0 %v88
  %107 = vmatpush.bf16.msra.mxu0 %v87
  %108 = vmatmul.bf16.gmra.mxu0 %v31
  %v109 = vpop.f32.mrf.mxu0
  %v110 = vadd.f32 0.0, %v109
  %v111 = vpop.f32.mrf.mxu0
  %v112 = vadd.f32 0.0, %v111
  %113 = vdwg.mxu0
  %114 = vmatpush.bf16.msra.mxu0 0
  %115 = vmatpush.bf16.msra.mxu0 0
  %116 = vmatpush.bf16.msra.mxu0 0
  %117 = vmatpush.bf16.msra.mxu0 0
  %118 = vmatpush.bf16.msra.mxu0 0
  %119 = vmatpush.bf16.msra.mxu0 0
  %120 = vmatpush.bf16.msra.mxu0 0
  %121 = vmatpush.bf16.msra.mxu0 %v95
  %122 = vmatmul.bf16.gmra.mxu0 %v98
  %v123 = vpop.f32.mrf.mxu0
  %v124 = vadd.f32 %v110, %v123
  %v125 = vpop.f32.mrf.mxu0
  %v126 = vadd.f32 %v112, %v125
  %127 = vdwg.mxu0
  %v128 = vld [vmem:[%s2] sm:$0xff]
  %v129 = vld [vmem:[%s2 + $0x8] sm:$0xff]
  %131 = vset.pattern.permute.xlu0 0
  %132 = vperm.xlu0 %131, %v128
  %v133 = vpop.permute.xlu0 %132
  %136 = vset.pattern.permute.xlu0 0
  %137 = vperm.xlu0 %136, %v129
  %v138 = vpop.permute.xlu0 %137
  %v140 = vmul.f32 %v124, %v133
  %v141 = vmul.f32 %v126, %v138
  %v142 = vld [vmem:[%s3] sm:$0xff]
  %v143 = vld [vmem:[%s3 + $0x8] sm:$0xff]
  %145 = vset.pattern.permute.xlu0 0
  %146 = vperm.xlu0 %145, %v142
  %v147 = vpop.permute.xlu0 %146
  %150 = vset.pattern.permute.xlu0 0
  %151 = vperm.xlu0 %150, %v143
  %v152 = vpop.permute.xlu0 %151
  %v154 = vadd.f32 %v140, %v147
  %v155 = vadd.f32 %v141, %v152
  %v156 = vld [vmem:[%s4] sm:$0xff]
  %v157 = vld [vmem:[%s4 + $0x8] sm:$0xff]
  %v158 = vadd.f32 %v154, %v156
  %v159 = vadd.f32 %v155, %v157
  %160 = vst [vmem:[%s5] sm:$0xff] %v158
  %161 = vst [vmem:[%s5 + $0x8] sm:$0xff] %v159
  // Predicated region
  $region22: #{_lambda_.7} parent=0 // pred_check
    _
  $region23: #{_lambda_.7} parent=0 // pred_check_branch
    %163 = sbr.rel (0) target = $region25
  $region24: #{_lambda_.7} parent=0 // pred_region
    _
  $region25: #{_lambda_.7} parent=0 // pred_fallthru
    _
  // Predicated region
  $region26: #{_lambda_.7} parent=0 // pred_check
    _
  $region27: #{_lambda_.7} parent=0 // pred_check_branch
    %165 = sbr.rel (0) target = $region29
  $region28: #{_lambda_.7} parent=0 // pred_region
    _
  $region29: #{_lambda_.7} parent=0 // pred_fallthru
    _

// kernel: _lambda_.8
$region0: #{_lambda_.8}
  #allocation0 [shape = 'u32[]', space=smem, size = 0x4, offset = 0x4, fixed_abs, tag = 'smem constant byte address 0x4 - core index']
  #allocation1 [shape = 'u32[72,128]{1,0:T(1,128)}', space=vmem, size = 0x9000, scoped, tag = 'internal scratch']
  %s0 = inlined_call_operand.vmem [shape: bf16[32,16], index: 0, kind: input, shape index: {}]
  %s1 = inlined_call_operand.vmem [shape: bf16[16,32], index: 1, kind: input, shape index: {}]
  %s2 = inlined_call_operand.vmem [shape: f32[32,1], index: 2, kind: input, shape index: {}]
  %s3 = inlined_call_operand.vmem [shape: f32[32,1], index: 3, kind: input, shape index: {}]
  %s4 = inlined_call_operand.vmem [shape: f32[32,32], index: 4, kind: output, shape index: {}]
  %s5 = sld [smem:[#allocation0]]
  $region26: #{_lambda_.8} parent=0
    _
  %s7 = ssub.s32 1, %s5
  %s8 = scalar_select 0, %s7, %s5
  // Predicated region
  $region2: #{_lambda_.8} parent=0 // pred_check
    _
  $region3: #{_lambda_.8} parent=0 // pred_check_branch
    %10 = sbr.rel (0) target = $region5
  $region4: #{_lambda_.8} parent=0 // pred_region
    _
  $region5: #{_lambda_.8} parent=0 // pred_fallthru
    _
  // Predicated region
  $region6: #{_lambda_.8} parent=0 // pred_check
    _
  $region7: #{_lambda_.8} parent=0 // pred_check_branch
    %12 = sbr.rel (0) target = $region9
  $region8: #{_lambda_.8} parent=0 // pred_region
    _
  $region9: #{_lambda_.8} parent=0 // pred_fallthru
    _
  // Predicated region
  $region10: #{_lambda_.8} parent=0 // pred_check
    _
  $region11: #{_lambda_.8} parent=0 // pred_check_branch
    %14 = sbr.rel (0) target = $region13
  $region12: #{_lambda_.8} parent=0 // pred_region
    _
  $region13: #{_lambda_.8} parent=0 // pred_fallthru
    _
  // Predicated region
  $region14: #{_lambda_.8} parent=0 // pred_check
    _
  $region15: #{_lambda_.8} parent=0 // pred_check_branch
    %16 = sbr.rel (0) target = $region17
  $region16: #{_lambda_.8} parent=0 // pred_region
    _
  $region17: #{_lambda_.8} parent=0 // pred_fallthru
    _
  %v18 = vld [vmem:[%s0] sm:$0xf]
  %v19 = vld [vmem:[%s0 + $0x4] sm:$0xf]
  %v20 = vld [vmem:[%s0 + $0x8] sm:$0xf]
  %v21 = vld [vmem:[%s0 + $0xc] sm:$0xf]
  %v22 = vld [vmem:[%s1] sm:$0xf]
  %v23 = vld [vmem:[%s1 + $0x4] sm:$0xf]
  %v28 = vunpack.c.l.b16 %v18
  %v29 = vunpack.c.l.b16 %v19
  %v30 = vunpack.c.l.b16 %v20
  %v31 = vunpack.c.l.b16 %v21
  %v32 = vpack.c.b16 %v29, %v28
  %v33 = vpack.c.b16 %v31, %v30
  %v36 = vunpack.c.l.b16 %v22
  %v37 = vunpack.c.l.b16 %v23
  %v38 = vpack.c.b16 %v37, %v36
  %vm40 = vcmask 130048
  %v42 = vsel %vm40, %v32, 0
  %v45 = vsel %vm40, %v33, 0
  %47 = vmatpush.bf16.msra.mxu0 0
  %48 = vmatpush.bf16.msra.mxu0 0
  %49 = vmatpush.bf16.msra.mxu0 0
  %50 = vmatpush.bf16.msra.mxu0 0
  %51 = vmatpush.bf16.msra.mxu0 0
  %52 = vmatpush.bf16.msra.mxu0 0
  %53 = vmatpush.bf16.msra.mxu0 0
  %54 = vmatpush.bf16.msra.mxu0 %v38
  %55 = vmatmul.bf16.gmra.mxu0 %v42
  %v56 = vpop.f32.mrf.mxu0
  %v57 = vadd.f32 0.0, %v56
  %v58 = vpop.f32.mrf.mxu0
  %v59 = vadd.f32 0.0, %v58
  %60 = vmatmul.bf16.gmra.mxu0 %v45
  %v61 = vpop.f32.mrf.mxu0
  %v62 = vadd.f32 0.0, %v61
  %v63 = vpop.f32.mrf.mxu0
  %v64 = vadd.f32 0.0, %v63
  %65 = vdwg.mxu0
  %v66 = vld [vmem:[%s2] sm:$0xff]
  %v67 = vld [vmem:[%s2 + $0x8] sm:$0xff]
  %v68 = vld [vmem:[%s2 + $0x10] sm:$0xff]
  %v69 = vld [vmem:[%s2 + $0x18] sm:$0xff]
  %71 = vset.pattern.permute.xlu0 0
  %72 = vperm.xlu0 %71, %v66
  %v73 = vpop.permute.xlu0 %72
  %76 = vset.pattern.permute.xlu0 0
  %77 = vperm.xlu0 %76, %v67
  %v78 = vpop.permute.xlu0 %77
  %81 = vset.pattern.permute.xlu0 0
  %82 = vperm.xlu0 %81, %v68
  %v83 = vpop.permute.xlu0 %82
  %86 = vset.pattern.permute.xlu0 0
  %87 = vperm.xlu0 %86, %v69
  %v88 = vpop.permute.xlu0 %87
  %v90 = vmul.f32 %v57, %v73
  %v91 = vmul.f32 %v59, %v78
  %v92 = vmul.f32 %v62, %v83
  %v93 = vmul.f32 %v64, %v88
  %v94 = vld [vmem:[%s3] sm:$0xff]
  %v95 = vld [vmem:[%s3 + $0x8] sm:$0xff]
  %v96 = vld [vmem:[%s3 + $0x10] sm:$0xff]
  %v97 = vld [vmem:[%s3 + $0x18] sm:$0xff]
  %99 = vset.pattern.permute.xlu0 0
  %100 = vperm.xlu0 %99, %v94
  %v101 = vpop.permute.xlu0 %100
  %104 = vset.pattern.permute.xlu0 0
  %105 = vperm.xlu0 %104, %v95
  %v106 = vpop.permute.xlu0 %105
  %109 = vset.pattern.permute.xlu0 0
  %110 = vperm.xlu0 %109, %v96
  %v111 = vpop.permute.xlu0 %110
  %114 = vset.pattern.permute.xlu0 0
  %115 = vperm.xlu0 %114, %v97
  %v116 = vpop.permute.xlu0 %115
  %v118 = vadd.f32 %v90, %v101
  %v119 = vadd.f32 %v91, %v106
  %v120 = vadd.f32 %v92, %v111
  %v121 = vadd.f32 %v93, %v116
  %vm122 = vcmask 261120
  %123 = vst.msk [vmem:[%s4] sm:$0xff] %vm122, %v118
  %124 = vst.msk [vmem:[%s4 + $0x8] sm:$0xff] %vm122, %v119
  %125 = vst.msk [vmem:[%s4 + $0x10] sm:$0xff] %vm122, %v120
  %126 = vst.msk [vmem:[%s4 + $0x18] sm:$0xff] %vm122, %v121
  // Predicated region
  $region18: #{_lambda_.8} parent=0 // pred_check
    _
  $region19: #{_lambda_.8} parent=0 // pred_check_branch
    %128 = sbr.rel (0) target = $region21
  $region20: #{_lambda_.8} parent=0 // pred_region
    _
  $region21: #{_lambda_.8} parent=0 // pred_fallthru
    _
  // Predicated region
  $region22: #{_lambda_.8} parent=0 // pred_check
    _
  $region23: #{_lambda_.8} parent=0 // pred_check_branch
    %130 = sbr.rel (0) target = $region25
  $region24: #{_lambda_.8} parent=0 // pred_region
    _
  $region25: #{_lambda_.8} parent=0 // pred_fallthru
    _

// kernel: _lambda_.9
$region0: #{_lambda_.9}
  #allocation0 [shape = 'u32[]', space=smem, size = 0x4, offset = 0x4, fixed_abs, tag = 'smem constant byte address 0x4 - core index']
  #allocation1 [shape = 'u32[72,128]{1,0:T(1,128)}', space=vmem, size = 0x9000, scoped, tag = 'internal scratch']
  %s0 = inlined_call_operand.vmem [shape: s8[32,144], index: 0, kind: input, shape index: {}]
  %s1 = inlined_call_operand.vmem [shape: s8[144,32], index: 1, kind: input, shape index: {}]
  %s2 = inlined_call_operand.vmem [shape: f32[32,1], index: 2, kind: input, shape index: {}]
  %s3 = inlined_call_operand.vmem [shape: f32[32,1], index: 3, kind: input, shape index: {}]
  %s4 = inlined_call_operand.vmem [shape: f32[32,32], index: 4, kind: input, shape index: {}, may-alias: {4,5}]
  %s5 = inlined_call_operand.vmem [shape: f32[32,32], index: 5, kind: output, shape index: {}, may-alias: {4,5}]
  %s6 = sld [smem:[#allocation0]]
  $region30: #{_lambda_.9} parent=0
    _
  %s8 = ssub.s32 1, %s6
  %s9 = scalar_select 0, %s8, %s6
  // Predicated region
  $region2: #{_lambda_.9} parent=0 // pred_check
    _
  $region3: #{_lambda_.9} parent=0 // pred_check_branch
    %11 = sbr.rel (0) target = $region5
  $region4: #{_lambda_.9} parent=0 // pred_region
    _
  $region5: #{_lambda_.9} parent=0 // pred_fallthru
    _
  // Predicated region
  $region6: #{_lambda_.9} parent=0 // pred_check
    _
  $region7: #{_lambda_.9} parent=0 // pred_check_branch
    %13 = sbr.rel (0) target = $region9
  $region8: #{_lambda_.9} parent=0 // pred_region
    _
  $region9: #{_lambda_.9} parent=0 // pred_fallthru
    _
  // Predicated region
  $region10: #{_lambda_.9} parent=0 // pred_check
    _
  $region11: #{_lambda_.9} parent=0 // pred_check_branch
    %15 = sbr.rel (0) target = $region13
  $region12: #{_lambda_.9} parent=0 // pred_region
    _
  $region13: #{_lambda_.9} parent=0 // pred_fallthru
    _
  // Predicated region
  $region14: #{_lambda_.9} parent=0 // pred_check
    _
  $region15: #{_lambda_.9} parent=0 // pred_check_branch
    %17 = sbr.rel (0) target = $region17
  $region16: #{_lambda_.9} parent=0 // pred_region
    _
  $region17: #{_lambda_.9} parent=0 // pred_fallthru
    _
  // Predicated region
  $region18: #{_lambda_.9} parent=0 // pred_check
    _
  $region19: #{_lambda_.9} parent=0 // pred_check_branch
    %19 = sbr.rel (0) target = $region21
  $region20: #{_lambda_.9} parent=0 // pred_region
    _
  $region21: #{_lambda_.9} parent=0 // pred_fallthru
    _
  %v21 = vld [vmem:[%s0] sm:$0xff]
  %v22 = vld [vmem:[%s0 + $0x8] sm:$0xff]
  %v23 = vunpack.c.0.s8 %v21
  %v24 = vunpack.c.0.s8 %v22
  %v25 = vunpack.c.1.s8 %v21
  %v26 = vunpack.c.1.s8 %v22
  %v27 = vunpack.c.2.s8 %v21
  %v28 = vunpack.c.2.s8 %v22
  %v29 = vunpack.c.3.s8 %v21
  %v30 = vunpack.c.3.s8 %v22
  %v31 = vcvt.s32.f32 %v23
  %v32 = vcvt.s32.f32 %v24
  %v33 = vcvt.s32.f32 %v25
  %v34 = vcvt.s32.f32 %v26
  %v35 = vcvt.s32.f32 %v27
  %v36 = vcvt.s32.f32 %v28
  %v37 = vcvt.s32.f32 %v29
  %v38 = vcvt.s32.f32 %v30
  %v39 = vpack.c.bf16 %v33, %v31
  %v40 = vpack.c.bf16 %v34, %v32
  %v41 = vpack.c.bf16 %v37, %v35
  %v42 = vpack.c.bf16 %v38, %v36
  %v43 = vld [vmem:[%s1] sm:$0x3]
  %v44 = vld [vmem:[%s1 + $0x2] sm:$0x3]
  %v45 = vld [vmem:[%s1 + $0x4] sm:$0x3]
  %v46 = vld [vmem:[%s1 + $0x6] sm:$0x3]
  %v47 = vld [vmem:[%s1 + $0x8] sm:$0x3]
  %v48 = vld [vmem:[%s1 + $0xa] sm:$0x3]
  %v49 = vld [vmem:[%s1 + $0xc] sm:$0x3]
  %v50 = vld [vmem:[%s1 + $0xe] sm:$0x3]
  %v51 = vld [vmem:[%s1 + $0x10] sm:$0x3]
  %v52 = vld [vmem:[%s1 + $0x12] sm:$0x3]
  %v53 = vld [vmem:[%s1 + $0x14] sm:$0x3]
  %v54 = vld [vmem:[%s1 + $0x16] sm:$0x3]
  %v55 = vld [vmem:[%s1 + $0x18] sm:$0x3]
  %v56 = vld [vmem:[%s1 + $0x1a] sm:$0x3]
  %v57 = vld [vmem:[%s1 + $0x1c] sm:$0x3]
  %v58 = vld [vmem:[%s1 + $0x1e] sm:$0x3]
  %v59 = vld [vmem:[%s1 + $0x20] sm:$0x3]
  %v60 = vld [vmem:[%s1 + $0x22] sm:$0x3]
  %v61 = vunpack.c.0.s8 %v43
  %v62 = vunpack.c.0.s8 %v44
  %v63 = vunpack.c.0.s8 %v45
  %v64 = vunpack.c.0.s8 %v46
  %v65 = vunpack.c.0.s8 %v47
  %v66 = vunpack.c.0.s8 %v48
  %v67 = vunpack.c.0.s8 %v49
  %v68 = vunpack.c.0.s8 %v50
  %v69 = vunpack.c.0.s8 %v51
  %v70 = vunpack.c.0.s8 %v52
  %v71 = vunpack.c.0.s8 %v53
  %v72 = vunpack.c.0.s8 %v54
  %v73 = vunpack.c.0.s8 %v55
  %v74 = vunpack.c.0.s8 %v56
  %v75 = vunpack.c.0.s8 %v57
  %v76 = vunpack.c.0.s8 %v58
  %v77 = vunpack.c.0.s8 %v59
  %v78 = vunpack.c.0.s8 %v60
  %v79 = vcvt.s32.f32 %v61
  %v80 = vcvt.s32.f32 %v62
  %v81 = vcvt.s32.f32 %v63
  %v82 = vcvt.s32.f32 %v64
  %v83 = vcvt.s32.f32 %v65
  %v84 = vcvt.s32.f32 %v66
  %v85 = vcvt.s32.f32 %v67
  %v86 = vcvt.s32.f32 %v68
  %v87 = vcvt.s32.f32 %v69
  %v88 = vcvt.s32.f32 %v70
  %v89 = vcvt.s32.f32 %v71
  %v90 = vcvt.s32.f32 %v72
  %v91 = vcvt.s32.f32 %v73
  %v92 = vcvt.s32.f32 %v74
  %v93 = vcvt.s32.f32 %v75
  %v94 = vcvt.s32.f32 %v76
  %v95 = vcvt.s32.f32 %v77
  %v96 = vcvt.s32.f32 %v78
  %v97 = vpack.c.bf16 %v80, %v79
  %v98 = vpack.c.bf16 %v82, %v81
  %v99 = vpack.c.bf16 %v84, %v83
  %v100 = vpack.c.bf16 %v86, %v85
  %v101 = vpack.c.bf16 %v88, %v87
  %v102 = vpack.c.bf16 %v90, %v89
  %v103 = vpack.c.bf16 %v92, %v91
  %v104 = vpack.c.bf16 %v94, %v93
  %v105 = vpack.c.bf16 %v96, %v95
  %vm106 = vcmask 130048
  %v108 = vsel %vm106, %v40, 0
  %v111 = vsel %vm106, %v42, 0
  %113 = vmatpush.bf16.msra.mxu0 %v104
  %114 = vmatpush.bf16.msra.mxu0 %v103
  %115 = vmatpush.bf16.msra.mxu0 %v102
  %116 = vmatpush.bf16.msra.mxu0 %v101
  %117 = vmatpush.bf16.msra.mxu0 %v100
  %118 = vmatpush.bf16.msra.mxu0 %v99
  %119 = vmatpush.bf16.msra.mxu0 %v98
  %120 = vmatpush.bf16.msra.mxu0 %v97
  %121 = vmatmul.bf16.gmra.mxu0 %v39
  %v122 = vpop.f32.mrf.mxu0
  %v123 = vadd.f32 0.0, %v122
  %v124 = vpop.f32.mrf.mxu0
  %v125 = vadd.f32 0.0, %v124
  %126 = vmatmul.bf16.gmra.mxu0 %v41
  %v127 = vpop.f32.mrf.mxu0
  %v128 = vadd.f32 0.0, %v127
  %v129 = vpop.f32.mrf.mxu0
  %v130 = vadd.f32 0.0, %v129
  %131 = vdwg.mxu0
  %132 = vmatpush.bf16.msra.mxu0 0
  %133 = vmatpush.bf16.msra.mxu0 0
  %134 = vmatpush.bf16.msra.mxu0 0
  %135 = vmatpush.bf16.msra.mxu0 0
  %136 = vmatpush.bf16.msra.mxu0 0
  %137 = vmatpush.bf16.msra.mxu0 0
  %138 = vmatpush.bf16.msra.mxu0 0
  %139 = vmatpush.bf16.msra.mxu0 %v105
  %140 = vmatmul.bf16.gmra.mxu0 %v108
  %v141 = vpop.f32.mrf.mxu0
  %v142 = vadd.f32 %v123, %v141
  %v143 = vpop.f32.mrf.mxu0
  %v144 = vadd.f32 %v125, %v143
  %145 = vmatmul.bf16.gmra.mxu0 %v111
  %v146 = vpop.f32.mrf.mxu0
  %v147 = vadd.f32 %v128, %v146
  %v148 = vpop.f32.mrf.mxu0
  %v149 = vadd.f32 %v130, %v148
  %150 = vdwg.mxu0
  %v151 = vld [vmem:[%s2] sm:$0xff]
  %v152 = vld [vmem:[%s2 + $0x8] sm:$0xff]
  %v153 = vld [vmem:[%s2 + $0x10] sm:$0xff]
  %v154 = vld [vmem:[%s2 + $0x18] sm:$0xff]
  %156 = vset.pattern.permute.xlu0 0
  %157 = vperm.xlu0 %156, %v151
  %v158 = vpop.permute.xlu0 %157
  %161 = vset.pattern.permute.xlu0 0
  %162 = vperm.xlu0 %161, %v152
  %v163 = vpop.permute.xlu0 %162
  %166 = vset.pattern.permute.xlu0 0
  %167 = vperm.xlu0 %166, %v153
  %v168 = vpop.permute.xlu0 %167
  %171 = vset.pattern.permute.xlu0 0
  %172 = vperm.xlu0 %171, %v154
  %v173 = vpop.permute.xlu0 %172
  %v175 = vmul.f32 %v142, %v158
  %v176 = vmul.f32 %v144, %v163
  %v177 = vmul.f32 %v147, %v168
  %v178 = vmul.f32 %v149, %v173
  %v179 = vld [vmem:[%s3] sm:$0xff]
  %v180 = vld [vmem:[%s3 + $0x8] sm:$0xff]
  %v181 = vld [vmem:[%s3 + $0x10] sm:$0xff]
  %v182 = vld [vmem:[%s3 + $0x18] sm:$0xff]
  %184 = vset.pattern.permute.xlu0 0
  %185 = vperm.xlu0 %184, %v179
  %v186 = vpop.permute.xlu0 %185
  %189 = vset.pattern.permute.xlu0 0
  %190 = vperm.xlu0 %189, %v180
  %v191 = vpop.permute.xlu0 %190
  %194 = vset.pattern.permute.xlu0 0
  %195 = vperm.xlu0 %194, %v181
  %v196 = vpop.permute.xlu0 %195
  %199 = vset.pattern.permute.xlu0 0
  %200 = vperm.xlu0 %199, %v182
  %v201 = vpop.permute.xlu0 %200
  %v203 = vadd.f32 %v175, %v186
  %v204 = vadd.f32 %v176, %v191
  %v205 = vadd.f32 %v177, %v196
  %v206 = vadd.f32 %v178, %v201
  %v207 = vld [vmem:[%s4] sm:$0xff]
  %v208 = vld [vmem:[%s4 + $0x8] sm:$0xff]
  %v209 = vld [vmem:[%s4 + $0x10] sm:$0xff]
  %v210 = vld [vmem:[%s4 + $0x18] sm:$0xff]
  %v211 = vadd.f32 %v203, %v207
  %v212 = vadd.f32 %v204, %v208
  %v213 = vadd.f32 %v205, %v209
  %v214 = vadd.f32 %v206, %v210
  %vm215 = vcmask 261120
  %216 = vst.msk [vmem:[%s5] sm:$0xff] %vm215, %v211
  %217 = vst.msk [vmem:[%s5 + $0x8] sm:$0xff] %vm215, %v212
  %218 = vst.msk [vmem:[%s5 + $0x10] sm:$0xff] %vm215, %v213
  %219 = vst.msk [vmem:[%s5 + $0x18] sm:$0xff] %vm215, %v214
  // Predicated region
  $region22: #{_lambda_.9} parent=0 // pred_check
    _
  $region23: #{_lambda_.9} parent=0 // pred_check_branch
    %221 = sbr.rel (0) target = $region25
  $region24: #{_lambda_.9} parent=0 // pred_region
    _
  $region25: #{_lambda_.9} parent=0 // pred_fallthru
    _
  // Predicated region
  $region26: #{_lambda_.9} parent=0 // pred_check
    _
  $region27: #{_lambda_.9} parent=0 // pred_check_branch
    %223 = sbr.rel (0) target = $region29
  $region28: #{_lambda_.9} parent=0 // pred_region
    _
  $region29: #{_lambda_.9} parent=0 // pred_fallthru
    _

// kernel: _lambda_.10
$region0: #{_lambda_.10}
  #allocation0 [shape = 'u32[]', space=smem, size = 0x4, offset = 0x4, fixed_abs, tag = 'smem constant byte address 0x4 - core index']
  #allocation1 [shape = 'u32[72,128]{1,0:T(1,128)}', space=vmem, size = 0x9000, scoped, tag = 'internal scratch']
  %s0 = inlined_call_operand.vmem [shape: bf16[8,32], index: 0, kind: input, shape index: {}]
  %s1 = inlined_call_operand.vmem [shape: bf16[32,64], index: 1, kind: input, shape index: {}]
  %s2 = inlined_call_operand.vmem [shape: f32[1,64], index: 2, kind: input, shape index: {}]
  %s3 = inlined_call_operand.vmem [shape: f32[1,64], index: 3, kind: input, shape index: {}]
  %s4 = inlined_call_operand.vmem [shape: f32[8,64], index: 4, kind: output, shape index: {}]
  %s5 = sld [smem:[#allocation0]]
  $region26: #{_lambda_.10} parent=0
    _
  %s7 = ssub.s32 1, %s5
  %s8 = scalar_select 0, %s7, %s5
  // Predicated region
  $region2: #{_lambda_.10} parent=0 // pred_check
    _
  $region3: #{_lambda_.10} parent=0 // pred_check_branch
    %10 = sbr.rel (0) target = $region5
  $region4: #{_lambda_.10} parent=0 // pred_region
    _
  $region5: #{_lambda_.10} parent=0 // pred_fallthru
    _
  // Predicated region
  $region6: #{_lambda_.10} parent=0 // pred_check
    _
  $region7: #{_lambda_.10} parent=0 // pred_check_branch
    %12 = sbr.rel (0) target = $region9
  $region8: #{_lambda_.10} parent=0 // pred_region
    _
  $region9: #{_lambda_.10} parent=0 // pred_fallthru
    _
  // Predicated region
  $region10: #{_lambda_.10} parent=0 // pred_check
    _
  $region11: #{_lambda_.10} parent=0 // pred_check_branch
    %14 = sbr.rel (0) target = $region13
  $region12: #{_lambda_.10} parent=0 // pred_region
    _
  $region13: #{_lambda_.10} parent=0 // pred_fallthru
    _
  // Predicated region
  $region14: #{_lambda_.10} parent=0 // pred_check
    _
  $region15: #{_lambda_.10} parent=0 // pred_check_branch
    %16 = sbr.rel (0) target = $region17
  $region16: #{_lambda_.10} parent=0 // pred_region
    _
  $region17: #{_lambda_.10} parent=0 // pred_fallthru
    _
  %v18 = vld [vmem:[%s0] sm:$0xf]
  %v19 = vld [vmem:[%s1] sm:$0xf]
  %v20 = vld [vmem:[%s1 + $0x4] sm:$0xf]
  %v21 = vld [vmem:[%s1 + $0x8] sm:$0xf]
  %v22 = vld [vmem:[%s1 + $0xc] sm:$0xf]
  %v27 = vunpack.c.l.b16 %v19
  %v28 = vunpack.c.l.b16 %v20
  %v29 = vunpack.c.l.b16 %v21
  %v30 = vunpack.c.l.b16 %v22
  %v31 = vpack.c.b16 %v28, %v27
  %v32 = vpack.c.b16 %v30, %v29
  %vm35 = vcmask 261120
  %v37 = vsel %vm35, %v18, 0
  %39 = vmatpush.bf16.msra.mxu0 0
  %40 = vmatpush.bf16.msra.mxu0 0
  %41 = vmatpush.bf16.msra.mxu0 0
  %42 = vmatpush.bf16.msra.mxu0 0
  %43 = vmatpush.bf16.msra.mxu0 0
  %44 = vmatpush.bf16.msra.mxu0 0
  %45 = vmatpush.bf16.msra.mxu0 %v32
  %46 = vmatpush.bf16.msra.mxu0 %v31
  %47 = vmatmul.bf16.gmra.mxu0 %v37
  %v48 = vpop.f32.mrf.mxu0
  %v49 = vadd.f32 0.0, %v48
  %v50 = vpop.f32.mrf.mxu0
  %51 = vdwg.mxu0
  %v52 = vld [vmem:[%s2] sm:$0x1]
  %v54 = vperm.slane %v52, 0
  %v56 = vmul.f32 %v49, %v54
  %v57 = vld [vmem:[%s3] sm:$0x1]
  %v59 = vperm.slane %v57, 0
  %v61 = vadd.f32 %v56, %v59
  %vm62 = vcmask 523264
  %63 = vst.msk [vmem:[%s4] sm:$0xff] %vm62, %v61
  // Predicated region
  $region18: #{_lambda_.10} parent=0 // pred_check
    _
  $region19: #{_lambda_.10} parent=0 // pred_check_branch
    %65 = sbr.rel (0) target = $region21
  $region20: #{_lambda_.10} parent=0 // pred_region
    _
  $region21: #{_lambda_.10} parent=0 // pred_fallthru
    _
  // Predicated region
  $region22: #{_lambda_.10} parent=0 // pred_check
    _
  $region23: #{_lambda_.10} parent=0 // pred_check_branch
    %67 = sbr.rel (0) target = $region25
  $region24: #{_lambda_.10} parent=0 // pred_region
    _
  $region25: #{_lambda_.10} parent=0 // pred_fallthru
    _

// kernel: _lambda_.11
$region0: #{_lambda_.11}
  #allocation0 [shape = 'u32[]', space=smem, size = 0x4, offset = 0x4, fixed_abs, tag = 'smem constant byte address 0x4 - core index']
  #allocation1 [shape = 'u32[72,128]{1,0:T(1,128)}', space=vmem, size = 0x9000, scoped, tag = 'internal scratch']
  %s0 = inlined_call_operand.vmem [shape: s8[8,288], index: 0, kind: input, shape index: {}]
  %s1 = inlined_call_operand.vmem [shape: s8[288,64], index: 1, kind: input, shape index: {}]
  %s2 = inlined_call_operand.vmem [shape: f32[1,64], index: 2, kind: input, shape index: {}]
  %s3 = inlined_call_operand.vmem [shape: f32[1,64], index: 3, kind: input, shape index: {}]
  %s4 = inlined_call_operand.vmem [shape: f32[8,64], index: 4, kind: input, shape index: {}, may-alias: {4,5}]
  %s5 = inlined_call_operand.vmem [shape: f32[8,64], index: 5, kind: output, shape index: {}, may-alias: {4,5}]
  %s6 = sld [smem:[#allocation0]]
  $region30: #{_lambda_.11} parent=0
    _
  %s8 = ssub.s32 1, %s6
  %s9 = scalar_select 0, %s8, %s6
  // Predicated region
  $region2: #{_lambda_.11} parent=0 // pred_check
    _
  $region3: #{_lambda_.11} parent=0 // pred_check_branch
    %11 = sbr.rel (0) target = $region5
  $region4: #{_lambda_.11} parent=0 // pred_region
    _
  $region5: #{_lambda_.11} parent=0 // pred_fallthru
    _
  // Predicated region
  $region6: #{_lambda_.11} parent=0 // pred_check
    _
  $region7: #{_lambda_.11} parent=0 // pred_check_branch
    %13 = sbr.rel (0) target = $region9
  $region8: #{_lambda_.11} parent=0 // pred_region
    _
  $region9: #{_lambda_.11} parent=0 // pred_fallthru
    _
  // Predicated region
  $region10: #{_lambda_.11} parent=0 // pred_check
    _
  $region11: #{_lambda_.11} parent=0 // pred_check_branch
    %15 = sbr.rel (0) target = $region13
  $region12: #{_lambda_.11} parent=0 // pred_region
    _
  $region13: #{_lambda_.11} parent=0 // pred_fallthru
    _
  // Predicated region
  $region14: #{_lambda_.11} parent=0 // pred_check
    _
  $region15: #{_lambda_.11} parent=0 // pred_check_branch
    %17 = sbr.rel (0) target = $region17
  $region16: #{_lambda_.11} parent=0 // pred_region
    _
  $region17: #{_lambda_.11} parent=0 // pred_fallthru
    _
  // Predicated region
  $region18: #{_lambda_.11} parent=0 // pred_check
    _
  $region19: #{_lambda_.11} parent=0 // pred_check_branch
    %19 = sbr.rel (0) target = $region21
  $region20: #{_lambda_.11} parent=0 // pred_region
    _
  $region21: #{_lambda_.11} parent=0 // pred_fallthru
    _
  %v21 = vld [vmem:[%s0] sm:$0x3f]
  %v22 = vunpack.c.0.s8 %v21
  %v23 = vunpack.c.1.s8 %v21
  %v24 = vunpack.c.2.s8 %v21
  %v25 = vcvt.s32.f32 %v22
  %v26 = vcvt.s32.f32 %v23
  %v27 = vcvt.s32.f32 %v24
  %v28 = vpack.c.bf16 %v25, %v25
  %v29 = vpack.c.bf16 %v26, %v26
  %v30 = vpack.c.bf16 %v27, %v27
  %v31 = vld [vmem:[%s1] sm:$0xff]
  %v32 = vld [vmem:[%s1 + $0x8] sm:$0xff]
  %v33 = vld [vmem:[%s1 + $0x10] sm:$0xff]
  %v34 = vld [vmem:[%s1 + $0x18] sm:$0xff]
  %v35 = vld [vmem:[%s1 + $0x20] sm:$0xff]
  %v36 = vld [vmem:[%s1 + $0x28] sm:$0xff]
  %v37 = vld [vmem:[%s1 + $0x30] sm:$0xff]
  %v38 = vld [vmem:[%s1 + $0x38] sm:$0xff]
  %v39 = vld [vmem:[%s1 + $0x40] sm:$0xff]
  %v40 = vunpack.c.0.s8 %v31
  %v41 = vunpack.c.1.s8 %v31
  %v42 = vunpack.c.2.s8 %v31
  %v43 = vunpack.c.3.s8 %v31
  %v44 = vunpack.c.0.s8 %v32
  %v45 = vunpack.c.1.s8 %v32
  %v46 = vunpack.c.2.s8 %v32
  %v47 = vunpack.c.3.s8 %v32
  %v48 = vunpack.c.0.s8 %v33
  %v49 = vunpack.c.1.s8 %v33
  %v50 = vunpack.c.2.s8 %v33
  %v51 = vunpack.c.3.s8 %v33
  %v52 = vunpack.c.0.s8 %v34
  %v53 = vunpack.c.1.s8 %v34
  %v54 = vunpack.c.2.s8 %v34
  %v55 = vunpack.c.3.s8 %v34
  %v56 = vunpack.c.0.s8 %v35
  %v57 = vunpack.c.1.s8 %v35
  %v58 = vunpack.c.2.s8 %v35
  %v59 = vunpack.c.3.s8 %v35
  %v60 = vunpack.c.0.s8 %v36
  %v61 = vunpack.c.1.s8 %v36
  %v62 = vunpack.c.2.s8 %v36
  %v63 = vunpack.c.3.s8 %v36
  %v64 = vunpack.c.0.s8 %v37
  %v65 = vunpack.c.1.s8 %v37
  %v66 = vunpack.c.2.s8 %v37
  %v67 = vunpack.c.3.s8 %v37
  %v68 = vunpack.c.0.s8 %v38
  %v69 = vunpack.c.1.s8 %v38
  %v70 = vunpack.c.2.s8 %v38
  %v71 = vunpack.c.3.s8 %v38
  %v72 = vunpack.c.0.s8 %v39
  %v73 = vunpack.c.1.s8 %v39
  %v74 = vunpack.c.2.s8 %v39
  %v75 = vunpack.c.3.s8 %v39
  %v76 = vcvt.s32.f32 %v40
  %v77 = vcvt.s32.f32 %v41
  %v78 = vcvt.s32.f32 %v42
  %v79 = vcvt.s32.f32 %v43
  %v80 = vcvt.s32.f32 %v44
  %v81 = vcvt.s32.f32 %v45
  %v82 = vcvt.s32.f32 %v46
  %v83 = vcvt.s32.f32 %v47
  %v84 = vcvt.s32.f32 %v48
  %v85 = vcvt.s32.f32 %v49
  %v86 = vcvt.s32.f32 %v50
  %v87 = vcvt.s32.f32 %v51
  %v88 = vcvt.s32.f32 %v52
  %v89 = vcvt.s32.f32 %v53
  %v90 = vcvt.s32.f32 %v54
  %v91 = vcvt.s32.f32 %v55
  %v92 = vcvt.s32.f32 %v56
  %v93 = vcvt.s32.f32 %v57
  %v94 = vcvt.s32.f32 %v58
  %v95 = vcvt.s32.f32 %v59
  %v96 = vcvt.s32.f32 %v60
  %v97 = vcvt.s32.f32 %v61
  %v98 = vcvt.s32.f32 %v62
  %v99 = vcvt.s32.f32 %v63
  %v100 = vcvt.s32.f32 %v64
  %v101 = vcvt.s32.f32 %v65
  %v102 = vcvt.s32.f32 %v66
  %v103 = vcvt.s32.f32 %v67
  %v104 = vcvt.s32.f32 %v68
  %v105 = vcvt.s32.f32 %v69
  %v106 = vcvt.s32.f32 %v70
  %v107 = vcvt.s32.f32 %v71
  %v108 = vcvt.s32.f32 %v72
  %v109 = vcvt.s32.f32 %v73
  %v110 = vcvt.s32.f32 %v74
  %v111 = vcvt.s32.f32 %v75
  %v112 = vpack.c.bf16 %v77, %v76
  %v113 = vpack.c.bf16 %v79, %v78
  %v114 = vpack.c.bf16 %v81, %v80
  %v115 = vpack.c.bf16 %v83, %v82
  %v116 = vpack.c.bf16 %v85, %v84
  %v117 = vpack.c.bf16 %v87, %v86
  %v118 = vpack.c.bf16 %v89, %v88
  %v119 = vpack.c.bf16 %v91, %v90
  %v120 = vpack.c.bf16 %v93, %v92
  %v121 = vpack.c.bf16 %v95, %v94
  %v122 = vpack.c.bf16 %v97, %v96
  %v123 = vpack.c.bf16 %v99, %v98
  %v124 = vpack.c.bf16 %v101, %v100
  %v125 = vpack.c.bf16 %v103, %v102
  %v126 = vpack.c.bf16 %v105, %v104
  %v127 = vpack.c.bf16 %v107, %v106
  %v128 = vpack.c.bf16 %v109, %v108
  %v129 = vpack.c.bf16 %v111, %v110
  %vm130 = vcmask 261120
  %v132 = vsel %vm130, %v30, 0
  %134 = vmatpush.bf16.msra.mxu0 %v119
  %135 = vmatpush.bf16.msra.mxu0 %v118
  %136 = vmatpush.bf16.msra.mxu0 %v117
  %137 = vmatpush.bf16.msra.mxu0 %v116
  %138 = vmatpush.bf16.msra.mxu0 %v115
  %139 = vmatpush.bf16.msra.mxu0 %v114
  %140 = vmatpush.bf16.msra.mxu0 %v113
  %141 = vmatpush.bf16.msra.mxu0 %v112
  %142 = vmatmul.bf16.gmra.mxu0 %v28
  %v143 = vpop.f32.mrf.mxu0
  %v144 = vadd.f32 0.0, %v143
  %v145 = vpop.f32.mrf.mxu0
  %146 = vdwg.mxu0
  %147 = vmatpush.bf16.msra.mxu0 %v127
  %148 = vmatpush.bf16.msra.mxu0 %v126
  %149 = vmatpush.bf16.msra.mxu0 %v125
  %150 = vmatpush.bf16.msra.mxu0 %v124
  %151 = vmatpush.bf16.msra.mxu0 %v123
  %152 = vmatpush.bf16.msra.mxu0 %v122
  %153 = vmatpush.bf16.msra.mxu0 %v121
  %154 = vmatpush.bf16.msra.mxu0 %v120
  %155 = vmatmul.bf16.gmra.mxu0 %v29
  %v156 = vpop.f32.mrf.mxu0
  %v157 = vadd.f32 %v144, %v156
  %v158 = vpop.f32.mrf.mxu0
  %159 = vdwg.mxu0
  %160 = vmatpush.bf16.msra.mxu0 0
  %161 = vmatpush.bf16.msra.mxu0 0
  %162 = vmatpush.bf16.msra.mxu0 0
  %163 = vmatpush.bf16.msra.mxu0 0
  %164 = vmatpush.bf16.msra.mxu0 0
  %165 = vmatpush.bf16.msra.mxu0 0
  %166 = vmatpush.bf16.msra.mxu0 %v129
  %167 = vmatpush.bf16.msra.mxu0 %v128
  %168 = vmatmul.bf16.gmra.mxu0 %v132
  %v169 = vpop.f32.mrf.mxu0
  %v170 = vadd.f32 %v157, %v169
  %v171 = vpop.f32.mrf.mxu0
  %172 = vdwg.mxu0
  %v173 = vld [vmem:[%s2] sm:$0x1]
  %v175 = vperm.slane %v173, 0
  %v177 = vmul.f32 %v170, %v175
  %v178 = vld [vmem:[%s3] sm:$0x1]
  %v180 = vperm.slane %v178, 0
  %v182 = vadd.f32 %v177, %v180
  %v183 = vld [vmem:[%s4] sm:$0xff]
  %v184 = vadd.f32 %v182, %v183
  %vm185 = vcmask 523264
  %186 = vst.msk [vmem:[%s5] sm:$0xff] %vm185, %v184
  // Predicated region
  $region22: #{_lambda_.11} parent=0 // pred_check
    _
  $region23: #{_lambda_.11} parent=0 // pred_check_branch
    %188 = sbr.rel (0) target = $region25
  $region24: #{_lambda_.11} parent=0 // pred_region
    _
  $region25: #{_lambda_.11} parent=0 // pred_fallthru
    _
  // Predicated region
  $region26: #{_lambda_.11} parent=0 // pred_check
    _
  $region27: #{_lambda_.11} parent=0 // pred_check_branch
    %190 = sbr.rel (0) target = $region29
  $region28: #{_lambda_.11} parent=0 // pred_region
    _
  $region29: #{_lambda_.11} parent=0 // pred_fallthru
    _

</llo_original>
